<compile_context>
chip_gen: v5e
topology: v5e:2x2
jax: 0.10.0
libtpu: 0.0.40
codegen_flags: <defaults>
</compile_context>

<pallas_src>
import functools
import math

import jax
import jax.numpy as jnp
from jax.experimental import pallas as pl
from jax.experimental.pallas import tpu as pltpu


def cross_attn_kernel(x_ref, enc_ref, wq_ref, bq_ref, wk_ref, bk_ref,
                      wv_ref, bv_ref, wp_ref, bp_ref, o_ref):
    # x_ref  : (1, N, C)   decoder tokens for this batch element
    # enc_ref: (1, T, C)   encoder output for this batch element
    # wq_ref : (H, C, D)   per-head Q projection      bq_ref: (H, 1, D)
    # wk_ref : (H, C, D)   per-head K projection      bk_ref: (H, 1, D)
    # wv_ref : (H, C, D)   per-head V projection      bv_ref: (H, 1, D)
    # wp_ref : (H, D, C)   per-head output projection bp_ref: (1, C)
    # o_ref  : (1, N, C)
    n_heads = wq_ref.shape[0]
    head_dim = wq_ref.shape[2]

    x = x_ref[0]          # (N, C), native dtype -> straight into the MXU
    enc = enc_ref[0]      # (T, C)
    n_tok = x.shape[0]
    c = x.shape[1]

    scale = 1.0 / math.sqrt(head_dim)

    # Output accumulator in f32, seeded with the projection bias.
    acc = jnp.zeros((n_tok, c), jnp.float32) + bp_ref[...].astype(jnp.float32)

    # Static (unrolled) loop over heads; every matmul is a contiguous block.
    for h in range(n_heads):
        q_h = jnp.dot(x, wq_ref[h], preferred_element_type=jnp.float32)
        q_h = q_h + bq_ref[h].astype(jnp.float32)          # (N, D)
        k_h = jnp.dot(enc, wk_ref[h], preferred_element_type=jnp.float32)
        k_h = k_h + bk_ref[h].astype(jnp.float32)          # (T, D)
        v_h = jnp.dot(enc, wv_ref[h], preferred_element_type=jnp.float32)
        v_h = v_h + bv_ref[h].astype(jnp.float32)          # (T, D)

        # scaled dot-product attention (numerically stable softmax)
        s = jnp.dot(q_h, k_h.T, preferred_element_type=jnp.float32) * scale
        m = jnp.max(s, axis=-1, keepdims=True)
        p = jnp.exp(s - m)
        l = jnp.sum(p, axis=-1, keepdims=True)
        att = p / l                                        # (N, T)

        y_h = jnp.dot(att, v_h, preferred_element_type=jnp.float32)  # (N, D)

        # fold this head's slice of the output projection (avoids concat)
        acc = acc + jnp.dot(y_h, wp_ref[h], preferred_element_type=jnp.float32)

    # TODO(synk): attn_dropout / resid_dropout omitted (identity at inference).
    o_ref[0] = acc.astype(o_ref.dtype)


@functools.partial(jax.jit, static_argnames=("n_heads",))
def cross_attention_forward(x, enc, wq, bq, wkv, bkv, wp, bp, n_heads):
    """x: (B, N, C) decoder tokens; enc: (B, T, C) encoder output.

    Weights are stored (in_features, out_features), i.e. the transpose of
    PyTorch nn.Linear's (out, in) layout, so the math is plain `x @ W + b`.
    """
    B, N, C = x.shape
    T = enc.shape[1]
    assert C % n_heads == 0
    H = n_heads
    D = C // H

    # Host-side per-head weight layout (done once under jit; keeps the kernel
    # free of lane-dimension slicing / relayouts).
    wq3 = wq.reshape(C, H, D).transpose(1, 0, 2)            # (H, C, D)
    bq3 = bq.reshape(H, 1, D)
    wk3 = wkv[:, :C].reshape(C, H, D).transpose(1, 0, 2)    # (H, C, D)
    wv3 = wkv[:, C:].reshape(C, H, D).transpose(1, 0, 2)    # (H, C, D)
    bk3 = bkv[:C].reshape(H, 1, D)
    bv3 = bkv[C:].reshape(H, 1, D)
    wp3 = wp.reshape(H, D, C)                               # (H, D, C)
    bp2 = bp.reshape(1, C)

    # Advisory cost estimate: Q/K/V projections + QK^T + att@V + out proj.
    flops = 2 * B * (N * C * C + 2 * T * C * C + 2 * N * T * C + N * C * C)
    transcendentals = B * H * N * T                       # exp in softmax
    bytes_accessed = 4 * (x.size + enc.size + wq.size + wkv.size + wp.size
                          + bq.size + bkv.size + bp.size + B * N * C)

    const3 = lambda b: (0, 0, 0)   # weights: fetched once, reused every step
    out = pl.pallas_call(
        cross_attn_kernel,
        out_shape=jax.ShapeDtypeStruct((B, N, C), x.dtype),
        grid_spec=pltpu.PrefetchScalarGridSpec(
            num_scalar_prefetch=0,
            grid=(B,),
            in_specs=[
                pl.BlockSpec((1, N, C), lambda b: (b, 0, 0)),   # x
                pl.BlockSpec((1, T, C), lambda b: (b, 0, 0)),   # encoder out
                pl.BlockSpec((H, C, D), const3),                # Wq
                pl.BlockSpec((H, 1, D), const3),                # bq
                pl.BlockSpec((H, C, D), const3),                # Wk
                pl.BlockSpec((H, 1, D), const3),                # bk
                pl.BlockSpec((H, C, D), const3),                # Wv
                pl.BlockSpec((H, 1, D), const3),                # bv
                pl.BlockSpec((H, D, C), const3),                # Wproj
                pl.BlockSpec((1, C), lambda b: (0, 0)),         # bproj
            ],
            out_specs=pl.BlockSpec((1, N, C), lambda b: (b, 0, 0)),
        ),
        compiler_params=pltpu.CompilerParams(
            dimension_semantics=("parallel",)),               # megacore over B
        cost_estimate=pl.CostEstimate(
            flops=int(flops),
            transcendentals=int(transcendentals),
            bytes_accessed=int(bytes_accessed)),
    )(x, enc, wq3, bq3, wk3, bk3, wv3, bv3, wp3, bp2)
    return out


def _reference(x, enc, wq, bq, wkv, bkv, wp, bp, n_heads):
    B, N, C = x.shape
    T = enc.shape[1]
    D = C // n_heads
    q = x @ wq + bq                       # (B, N, C)
    kv = enc @ wkv + bkv                  # (B, T, 2C)
    k, v = kv[..., :C], kv[..., C:]
    q = q.reshape(B, N, n_heads, D).transpose(0, 2, 1, 3)   # (B, H, N, D)
    k = k.reshape(B, T, n_heads, D).transpose(0, 2, 1, 3)   # (B, H, T, D)
    v = v.reshape(B, T, n_heads, D).transpose(0, 2, 1, 3)   # (B, H, T, D)
    att = jnp.einsum("bhnd,bhtd->bhnt", q, k) * (1.0 / math.sqrt(D))
    att = jax.nn.softmax(att, axis=-1)
    y = jnp.einsum("bhnt,bhtd->bhnd", att, v)
    y = y.transpose(0, 2, 1, 3).reshape(B, N, C)
    return y @ wp + bp


if __name__ == "__main__":
    # config: n_embd=32, n_heads=4, bias=True, dropout=0.0 (identity at eval)
    B, N, T, C, H = 2, 8, 16, 32, 4

    key = jax.random.PRNGKey(0)
    kx, ke, kq, kbq, kkv, kbkv, kp, kbp = jax.random.split(key, 8)

    x = jax.random.normal(kx, (B, N, C), dtype=jnp.float32)       # decoder tokens
    enc = jax.random.normal(ke, (B, T, C), dtype=jnp.float32)     # encoder output

    # parameters in (in_features, out_features) layout
    wq = jax.random.normal(kq, (C, C), dtype=jnp.float32) * 0.05
    bq = jax.random.normal(kbq, (C,), dtype=jnp.float32) * 0.05
    wkv = jax.random.normal(kkv, (C, 2 * C), dtype=jnp.float32) * 0.05
    bkv = jax.random.normal(kbkv, (2 * C,), dtype=jnp.float32) * 0.05
    wp = jax.random.normal(kp, (C, C), dtype=jnp.float32) * 0.05
    bp = jax.random.normal(kbp, (C,), dtype=jnp.float32) * 0.05

    out = cross_attention_forward(x, enc, wq, bq, wkv, bkv, wp, bp, n_heads=H)
    out = jax.block_until_ready(out)

    ref = _reference(x, enc, wq, bq, wkv, bkv, wp, bp, H)
    assert out.shape == (B, N, C)
    assert jnp.allclose(out, ref, atol=2e-3, rtol=2e-3), "mismatch vs reference"

    print("KERNEL_OK")
</pallas_src>

<mosaic_0001>
module attributes {stable_mosaic.version = 11 : i64} {
  func.func @cross_attn_kernel(%arg0: i32, %arg1: memref<1x8x32xf32, #tpu.memory_space<vmem>>, %arg2: memref<1x16x32xf32, #tpu.memory_space<vmem>>, %arg3: memref<4x32x8xf32, #tpu.memory_space<vmem>>, %arg4: memref<4x1x8xf32, #tpu.memory_space<vmem>>, %arg5: memref<4x32x8xf32, #tpu.memory_space<vmem>>, %arg6: memref<4x1x8xf32, #tpu.memory_space<vmem>>, %arg7: memref<4x32x8xf32, #tpu.memory_space<vmem>>, %arg8: memref<4x1x8xf32, #tpu.memory_space<vmem>>, %arg9: memref<4x8x32xf32, #tpu.memory_space<vmem>>, %arg10: memref<1x32xf32, #tpu.memory_space<vmem>>, %arg11: memref<1x8x32xf32, #tpu.memory_space<vmem>>) attributes {dimension_semantics = [#tpu.dimension_semantics<parallel>], iteration_bounds = array<i64: 2>, scalar_prefetch = 0 : i64, scratch_operands = 0 : i64, tpu.core_type = #tpu.core_type<tc>, window_params = [{transform_indices = @transform_0, window_bounds = array<i64: 1, 8, 32>}, {transform_indices = @transform_1, window_bounds = array<i64: 1, 16, 32>}, {pipeline_mode = #tpu.pipeline_mode<synchronous>, transform_indices = @transform_2, window_bounds = array<i64: 4, 32, 8>}, {pipeline_mode = #tpu.pipeline_mode<synchronous>, transform_indices = @transform_3, window_bounds = array<i64: 4, 1, 8>}, {pipeline_mode = #tpu.pipeline_mode<synchronous>, transform_indices = @transform_4, window_bounds = array<i64: 4, 32, 8>}, {pipeline_mode = #tpu.pipeline_mode<synchronous>, transform_indices = @transform_5, window_bounds = array<i64: 4, 1, 8>}, {pipeline_mode = #tpu.pipeline_mode<synchronous>, transform_indices = @transform_6, window_bounds = array<i64: 4, 32, 8>}, {pipeline_mode = #tpu.pipeline_mode<synchronous>, transform_indices = @transform_7, window_bounds = array<i64: 4, 1, 8>}, {pipeline_mode = #tpu.pipeline_mode<synchronous>, transform_indices = @transform_8, window_bounds = array<i64: 4, 8, 32>}, {pipeline_mode = #tpu.pipeline_mode<synchronous>, transform_indices = @transform_9, window_bounds = array<i64: 1, 32>}, {transform_indices = @transform_10, window_bounds = array<i64: 1, 8, 32>}]} {
    %c0 = arith.constant 0 : index
    %c0_0 = arith.constant 0 : index
    %c0_1 = arith.constant 0 : index
    %0 = vector.load %arg1[%c0, %c0_0, %c0_1] : memref<1x8x32xf32, #tpu.memory_space<vmem>>, vector<1x8x32xf32>
    %1 = vector.shape_cast %0 : vector<1x8x32xf32> to vector<8x32xf32>
    %c0_2 = arith.constant 0 : index
    %c0_3 = arith.constant 0 : index
    %c0_4 = arith.constant 0 : index
    %2 = vector.load %arg2[%c0_2, %c0_3, %c0_4] : memref<1x16x32xf32, #tpu.memory_space<vmem>>, vector<1x16x32xf32>
    %3 = vector.shape_cast %2 : vector<1x16x32xf32> to vector<16x32xf32>
    %cst = arith.constant 0.000000e+00 : f32
    %4 = vector.broadcast %cst : f32 to vector<8x32xf32>
    %c0_5 = arith.constant 0 : index
    %c0_6 = arith.constant 0 : index
    %5 = vector.load %arg10[%c0_5, %c0_6] : memref<1x32xf32, #tpu.memory_space<vmem>>, vector<1x32xf32>
    %6 = vector.broadcast %5 : vector<1x32xf32> to vector<8x32xf32>
    %7 = arith.addf %4, %6 : vector<8x32xf32>
    %c0_7 = arith.constant 0 : index
    %c0_8 = arith.constant 0 : index
    %c0_9 = arith.constant 0 : index
    %8 = vector.load %arg3[%c0_7, %c0_8, %c0_9] : memref<4x32x8xf32, #tpu.memory_space<vmem>>, vector<1x32x8xf32>
    %9 = vector.shape_cast %8 : vector<1x32x8xf32> to vector<32x8xf32>
    %cst_10 = arith.constant dense<0.000000e+00> : vector<8x8xf32>
    %10 = tpu.matmul %1, %9, %cst_10 {dimension_numbers = #tpu.dot_dimension_numbers<[1], [0], [0], [1], [0, 0, 1, 1], [], []>} : vector<8x32xf32>, vector<32x8xf32>, vector<8x8xf32> -> vector<8x8xf32>
    %c0_11 = arith.constant 0 : index
    %c0_12 = arith.constant 0 : index
    %c0_13 = arith.constant 0 : index
    %11 = vector.load %arg4[%c0_11, %c0_12, %c0_13] : memref<4x1x8xf32, #tpu.memory_space<vmem>>, vector<1x1x8xf32>
    %12 = vector.shape_cast %11 : vector<1x1x8xf32> to vector<1x8xf32>
    %13 = vector.broadcast %12 : vector<1x8xf32> to vector<8x8xf32>
    %14 = arith.addf %10, %13 : vector<8x8xf32>
    %c0_14 = arith.constant 0 : index
    %c0_15 = arith.constant 0 : index
    %c0_16 = arith.constant 0 : index
    %15 = vector.load %arg5[%c0_14, %c0_15, %c0_16] : memref<4x32x8xf32, #tpu.memory_space<vmem>>, vector<1x32x8xf32>
    %16 = vector.shape_cast %15 : vector<1x32x8xf32> to vector<32x8xf32>
    %cst_17 = arith.constant dense<0.000000e+00> : vector<16x8xf32>
    %17 = tpu.matmul %3, %16, %cst_17 {dimension_numbers = #tpu.dot_dimension_numbers<[1], [0], [0], [1], [0, 0, 1, 1], [], []>} : vector<16x32xf32>, vector<32x8xf32>, vector<16x8xf32> -> vector<16x8xf32>
    %c0_18 = arith.constant 0 : index
    %c0_19 = arith.constant 0 : index
    %c0_20 = arith.constant 0 : index
    %18 = vector.load %arg6[%c0_18, %c0_19, %c0_20] : memref<4x1x8xf32, #tpu.memory_space<vmem>>, vector<1x1x8xf32>
    %19 = vector.shape_cast %18 : vector<1x1x8xf32> to vector<1x8xf32>
    %20 = vector.broadcast %19 : vector<1x8xf32> to vector<16x8xf32>
    %21 = arith.addf %17, %20 : vector<16x8xf32>
    %c0_21 = arith.constant 0 : index
    %c0_22 = arith.constant 0 : index
    %c0_23 = arith.constant 0 : index
    %22 = vector.load %arg7[%c0_21, %c0_22, %c0_23] : memref<4x32x8xf32, #tpu.memory_space<vmem>>, vector<1x32x8xf32>
    %23 = vector.shape_cast %22 : vector<1x32x8xf32> to vector<32x8xf32>
    %cst_24 = arith.constant dense<0.000000e+00> : vector<16x8xf32>
    %24 = tpu.matmul %3, %23, %cst_24 {dimension_numbers = #tpu.dot_dimension_numbers<[1], [0], [0], [1], [0, 0, 1, 1], [], []>} : vector<16x32xf32>, vector<32x8xf32>, vector<16x8xf32> -> vector<16x8xf32>
    %c0_25 = arith.constant 0 : index
    %c0_26 = arith.constant 0 : index
    %c0_27 = arith.constant 0 : index
    %25 = vector.load %arg8[%c0_25, %c0_26, %c0_27] : memref<4x1x8xf32, #tpu.memory_space<vmem>>, vector<1x1x8xf32>
    %26 = vector.shape_cast %25 : vector<1x1x8xf32> to vector<1x8xf32>
    %27 = vector.broadcast %26 : vector<1x8xf32> to vector<16x8xf32>
    %28 = arith.addf %24, %27 : vector<16x8xf32>
    %29 = tpu.transpose %21, [1, 0] : vector<16x8xf32> -> vector<8x16xf32>
    %cst_28 = arith.constant dense<0.000000e+00> : vector<8x16xf32>
    %30 = tpu.matmul %14, %29, %cst_28 {dimension_numbers = #tpu.dot_dimension_numbers<[1], [0], [0], [1], [0, 0, 1, 1], [], []>} : vector<8x8xf32>, vector<8x16xf32>, vector<8x16xf32> -> vector<8x16xf32>
    %cst_29 = arith.constant 0.353553385 : f32
    %31 = vector.broadcast %cst_29 : f32 to vector<8x16xf32>
    %32 = arith.mulf %30, %31 : vector<8x16xf32>
    %cst_30 = arith.constant dense<0xFF800000> : vector<8xf32>
    %33 = vector.multi_reduction <maximumf>, %32, %cst_30 [1] : vector<8x16xf32> to vector<8xf32>
    %34 = vector.shape_cast %33 : vector<8xf32> to vector<8x1xf32>
    %35 = vector.broadcast %34 : vector<8x1xf32> to vector<8x16xf32>
    %36 = arith.subf %32, %35 : vector<8x16xf32>
    %37 = math.exp %36 : vector<8x16xf32>
    %cst_31 = arith.constant dense<0.000000e+00> : vector<8xf32>
    %38 = vector.multi_reduction <add>, %37, %cst_31 [1] : vector<8x16xf32> to vector<8xf32>
    %39 = vector.shape_cast %38 : vector<8xf32> to vector<8x1xf32>
    %40 = vector.broadcast %39 : vector<8x1xf32> to vector<8x16xf32>
    %41 = arith.divf %37, %40 : vector<8x16xf32>
    %cst_32 = arith.constant dense<0.000000e+00> : vector<8x8xf32>
    %42 = tpu.matmul %41, %28, %cst_32 {dimension_numbers = #tpu.dot_dimension_numbers<[1], [0], [0], [1], [0, 0, 1, 1], [], []>} : vector<8x16xf32>, vector<16x8xf32>, vector<8x8xf32> -> vector<8x8xf32>
    %c0_33 = arith.constant 0 : index
    %c0_34 = arith.constant 0 : index
    %c0_35 = arith.constant 0 : index
    %43 = vector.load %arg9[%c0_33, %c0_34, %c0_35] : memref<4x8x32xf32, #tpu.memory_space<vmem>>, vector<1x8x32xf32>
    %44 = vector.shape_cast %43 : vector<1x8x32xf32> to vector<8x32xf32>
    %cst_36 = arith.constant dense<0.000000e+00> : vector<8x32xf32>
    %45 = tpu.matmul %42, %44, %cst_36 {dimension_numbers = #tpu.dot_dimension_numbers<[1], [0], [0], [1], [0, 0, 1, 1], [], []>} : vector<8x8xf32>, vector<8x32xf32>, vector<8x32xf32> -> vector<8x32xf32>
    %46 = arith.addf %7, %45 : vector<8x32xf32>
    %c1 = arith.constant 1 : index
    %c0_37 = arith.constant 0 : index
    %c0_38 = arith.constant 0 : index
    %47 = vector.load %arg3[%c1, %c0_37, %c0_38] : memref<4x32x8xf32, #tpu.memory_space<vmem>>, vector<1x32x8xf32>
    %48 = vector.shape_cast %47 : vector<1x32x8xf32> to vector<32x8xf32>
    %cst_39 = arith.constant dense<0.000000e+00> : vector<8x8xf32>
    %49 = tpu.matmul %1, %48, %cst_39 {dimension_numbers = #tpu.dot_dimension_numbers<[1], [0], [0], [1], [0, 0, 1, 1], [], []>} : vector<8x32xf32>, vector<32x8xf32>, vector<8x8xf32> -> vector<8x8xf32>
    %c1_40 = arith.constant 1 : index
    %c0_41 = arith.constant 0 : index
    %c0_42 = arith.constant 0 : index
    %50 = vector.load %arg4[%c1_40, %c0_41, %c0_42] : memref<4x1x8xf32, #tpu.memory_space<vmem>>, vector<1x1x8xf32>
    %51 = vector.shape_cast %50 : vector<1x1x8xf32> to vector<1x8xf32>
    %52 = vector.broadcast %51 : vector<1x8xf32> to vector<8x8xf32>
    %53 = arith.addf %49, %52 : vector<8x8xf32>
    %c1_43 = arith.constant 1 : index
    %c0_44 = arith.constant 0 : index
    %c0_45 = arith.constant 0 : index
    %54 = vector.load %arg5[%c1_43, %c0_44, %c0_45] : memref<4x32x8xf32, #tpu.memory_space<vmem>>, vector<1x32x8xf32>
    %55 = vector.shape_cast %54 : vector<1x32x8xf32> to vector<32x8xf32>
    %cst_46 = arith.constant dense<0.000000e+00> : vector<16x8xf32>
    %56 = tpu.matmul %3, %55, %cst_46 {dimension_numbers = #tpu.dot_dimension_numbers<[1], [0], [0], [1], [0, 0, 1, 1], [], []>} : vector<16x32xf32>, vector<32x8xf32>, vector<16x8xf32> -> vector<16x8xf32>
    %c1_47 = arith.constant 1 : index
    %c0_48 = arith.constant 0 : index
    %c0_49 = arith.constant 0 : index
    %57 = vector.load %arg6[%c1_47, %c0_48, %c0_49] : memref<4x1x8xf32, #tpu.memory_space<vmem>>, vector<1x1x8xf32>
    %58 = vector.shape_cast %57 : vector<1x1x8xf32> to vector<1x8xf32>
    %59 = vector.broadcast %58 : vector<1x8xf32> to vector<16x8xf32>
    %60 = arith.addf %56, %59 : vector<16x8xf32>
    %c1_50 = arith.constant 1 : index
    %c0_51 = arith.constant 0 : index
    %c0_52 = arith.constant 0 : index
    %61 = vector.load %arg7[%c1_50, %c0_51, %c0_52] : memref<4x32x8xf32, #tpu.memory_space<vmem>>, vector<1x32x8xf32>
    %62 = vector.shape_cast %61 : vector<1x32x8xf32> to vector<32x8xf32>
    %cst_53 = arith.constant dense<0.000000e+00> : vector<16x8xf32>
    %63 = tpu.matmul %3, %62, %cst_53 {dimension_numbers = #tpu.dot_dimension_numbers<[1], [0], [0], [1], [0, 0, 1, 1], [], []>} : vector<16x32xf32>, vector<32x8xf32>, vector<16x8xf32> -> vector<16x8xf32>
    %c1_54 = arith.constant 1 : index
    %c0_55 = arith.constant 0 : index
    %c0_56 = arith.constant 0 : index
    %64 = vector.load %arg8[%c1_54, %c0_55, %c0_56] : memref<4x1x8xf32, #tpu.memory_space<vmem>>, vector<1x1x8xf32>
    %65 = vector.shape_cast %64 : vector<1x1x8xf32> to vector<1x8xf32>
    %66 = vector.broadcast %65 : vector<1x8xf32> to vector<16x8xf32>
    %67 = arith.addf %63, %66 : vector<16x8xf32>
    %68 = tpu.transpose %60, [1, 0] : vector<16x8xf32> -> vector<8x16xf32>
    %cst_57 = arith.constant dense<0.000000e+00> : vector<8x16xf32>
    %69 = tpu.matmul %53, %68, %cst_57 {dimension_numbers = #tpu.dot_dimension_numbers<[1], [0], [0], [1], [0, 0, 1, 1], [], []>} : vector<8x8xf32>, vector<8x16xf32>, vector<8x16xf32> -> vector<8x16xf32>
    %cst_58 = arith.constant 0.353553385 : f32
    %70 = vector.broadcast %cst_58 : f32 to vector<8x16xf32>
    %71 = arith.mulf %69, %70 : vector<8x16xf32>
    %cst_59 = arith.constant dense<0xFF800000> : vector<8xf32>
    %72 = vector.multi_reduction <maximumf>, %71, %cst_59 [1] : vector<8x16xf32> to vector<8xf32>
    %73 = vector.shape_cast %72 : vector<8xf32> to vector<8x1xf32>
    %74 = vector.broadcast %73 : vector<8x1xf32> to vector<8x16xf32>
    %75 = arith.subf %71, %74 : vector<8x16xf32>
    %76 = math.exp %75 : vector<8x16xf32>
    %cst_60 = arith.constant dense<0.000000e+00> : vector<8xf32>
    %77 = vector.multi_reduction <add>, %76, %cst_60 [1] : vector<8x16xf32> to vector<8xf32>
    %78 = vector.shape_cast %77 : vector<8xf32> to vector<8x1xf32>
    %79 = vector.broadcast %78 : vector<8x1xf32> to vector<8x16xf32>
    %80 = arith.divf %76, %79 : vector<8x16xf32>
    %cst_61 = arith.constant dense<0.000000e+00> : vector<8x8xf32>
    %81 = tpu.matmul %80, %67, %cst_61 {dimension_numbers = #tpu.dot_dimension_numbers<[1], [0], [0], [1], [0, 0, 1, 1], [], []>} : vector<8x16xf32>, vector<16x8xf32>, vector<8x8xf32> -> vector<8x8xf32>
    %c1_62 = arith.constant 1 : index
    %c0_63 = arith.constant 0 : index
    %c0_64 = arith.constant 0 : index
    %82 = vector.load %arg9[%c1_62, %c0_63, %c0_64] : memref<4x8x32xf32, #tpu.memory_space<vmem>>, vector<1x8x32xf32>
    %83 = vector.shape_cast %82 : vector<1x8x32xf32> to vector<8x32xf32>
    %cst_65 = arith.constant dense<0.000000e+00> : vector<8x32xf32>
    %84 = tpu.matmul %81, %83, %cst_65 {dimension_numbers = #tpu.dot_dimension_numbers<[1], [0], [0], [1], [0, 0, 1, 1], [], []>} : vector<8x8xf32>, vector<8x32xf32>, vector<8x32xf32> -> vector<8x32xf32>
    %85 = arith.addf %46, %84 : vector<8x32xf32>
    %c2 = arith.constant 2 : index
    %c0_66 = arith.constant 0 : index
    %c0_67 = arith.constant 0 : index
    %86 = vector.load %arg3[%c2, %c0_66, %c0_67] : memref<4x32x8xf32, #tpu.memory_space<vmem>>, vector<1x32x8xf32>
    %87 = vector.shape_cast %86 : vector<1x32x8xf32> to vector<32x8xf32>
    %cst_68 = arith.constant dense<0.000000e+00> : vector<8x8xf32>
    %88 = tpu.matmul %1, %87, %cst_68 {dimension_numbers = #tpu.dot_dimension_numbers<[1], [0], [0], [1], [0, 0, 1, 1], [], []>} : vector<8x32xf32>, vector<32x8xf32>, vector<8x8xf32> -> vector<8x8xf32>
    %c2_69 = arith.constant 2 : index
    %c0_70 = arith.constant 0 : index
    %c0_71 = arith.constant 0 : index
    %89 = vector.load %arg4[%c2_69, %c0_70, %c0_71] : memref<4x1x8xf32, #tpu.memory_space<vmem>>, vector<1x1x8xf32>
    %90 = vector.shape_cast %89 : vector<1x1x8xf32> to vector<1x8xf32>
    %91 = vector.broadcast %90 : vector<1x8xf32> to vector<8x8xf32>
    %92 = arith.addf %88, %91 : vector<8x8xf32>
    %c2_72 = arith.constant 2 : index
    %c0_73 = arith.constant 0 : index
    %c0_74 = arith.constant 0 : index
    %93 = vector.load %arg5[%c2_72, %c0_73, %c0_74] : memref<4x32x8xf32, #tpu.memory_space<vmem>>, vector<1x32x8xf32>
    %94 = vector.shape_cast %93 : vector<1x32x8xf32> to vector<32x8xf32>
    %cst_75 = arith.constant dense<0.000000e+00> : vector<16x8xf32>
    %95 = tpu.matmul %3, %94, %cst_75 {dimension_numbers = #tpu.dot_dimension_numbers<[1], [0], [0], [1], [0, 0, 1, 1], [], []>} : vector<16x32xf32>, vector<32x8xf32>, vector<16x8xf32> -> vector<16x8xf32>
    %c2_76 = arith.constant 2 : index
    %c0_77 = arith.constant 0 : index
    %c0_78 = arith.constant 0 : index
    %96 = vector.load %arg6[%c2_76, %c0_77, %c0_78] : memref<4x1x8xf32, #tpu.memory_space<vmem>>, vector<1x1x8xf32>
    %97 = vector.shape_cast %96 : vector<1x1x8xf32> to vector<1x8xf32>
    %98 = vector.broadcast %97 : vector<1x8xf32> to vector<16x8xf32>
    %99 = arith.addf %95, %98 : vector<16x8xf32>
    %c2_79 = arith.constant 2 : index
    %c0_80 = arith.constant 0 : index
    %c0_81 = arith.constant 0 : index
    %100 = vector.load %arg7[%c2_79, %c0_80, %c0_81] : memref<4x32x8xf32, #tpu.memory_space<vmem>>, vector<1x32x8xf32>
    %101 = vector.shape_cast %100 : vector<1x32x8xf32> to vector<32x8xf32>
    %cst_82 = arith.constant dense<0.000000e+00> : vector<16x8xf32>
    %102 = tpu.matmul %3, %101, %cst_82 {dimension_numbers = #tpu.dot_dimension_numbers<[1], [0], [0], [1], [0, 0, 1, 1], [], []>} : vector<16x32xf32>, vector<32x8xf32>, vector<16x8xf32> -> vector<16x8xf32>
    %c2_83 = arith.constant 2 : index
    %c0_84 = arith.constant 0 : index
    %c0_85 = arith.constant 0 : index
    %103 = vector.load %arg8[%c2_83, %c0_84, %c0_85] : memref<4x1x8xf32, #tpu.memory_space<vmem>>, vector<1x1x8xf32>
    %104 = vector.shape_cast %103 : vector<1x1x8xf32> to vector<1x8xf32>
    %105 = vector.broadcast %104 : vector<1x8xf32> to vector<16x8xf32>
    %106 = arith.addf %102, %105 : vector<16x8xf32>
    %107 = tpu.transpose %99, [1, 0] : vector<16x8xf32> -> vector<8x16xf32>
    %cst_86 = arith.constant dense<0.000000e+00> : vector<8x16xf32>
    %108 = tpu.matmul %92, %107, %cst_86 {dimension_numbers = #tpu.dot_dimension_numbers<[1], [0], [0], [1], [0, 0, 1, 1], [], []>} : vector<8x8xf32>, vector<8x16xf32>, vector<8x16xf32> -> vector<8x16xf32>
    %cst_87 = arith.constant 0.353553385 : f32
    %109 = vector.broadcast %cst_87 : f32 to vector<8x16xf32>
    %110 = arith.mulf %108, %109 : vector<8x16xf32>
    %cst_88 = arith.constant dense<0xFF800000> : vector<8xf32>
    %111 = vector.multi_reduction <maximumf>, %110, %cst_88 [1] : vector<8x16xf32> to vector<8xf32>
    %112 = vector.shape_cast %111 : vector<8xf32> to vector<8x1xf32>
    %113 = vector.broadcast %112 : vector<8x1xf32> to vector<8x16xf32>
    %114 = arith.subf %110, %113 : vector<8x16xf32>
    %115 = math.exp %114 : vector<8x16xf32>
    %cst_89 = arith.constant dense<0.000000e+00> : vector<8xf32>
    %116 = vector.multi_reduction <add>, %115, %cst_89 [1] : vector<8x16xf32> to vector<8xf32>
    %117 = vector.shape_cast %116 : vector<8xf32> to vector<8x1xf32>
    %118 = vector.broadcast %117 : vector<8x1xf32> to vector<8x16xf32>
    %119 = arith.divf %115, %118 : vector<8x16xf32>
    %cst_90 = arith.constant dense<0.000000e+00> : vector<8x8xf32>
    %120 = tpu.matmul %119, %106, %cst_90 {dimension_numbers = #tpu.dot_dimension_numbers<[1], [0], [0], [1], [0, 0, 1, 1], [], []>} : vector<8x16xf32>, vector<16x8xf32>, vector<8x8xf32> -> vector<8x8xf32>
    %c2_91 = arith.constant 2 : index
    %c0_92 = arith.constant 0 : index
    %c0_93 = arith.constant 0 : index
    %121 = vector.load %arg9[%c2_91, %c0_92, %c0_93] : memref<4x8x32xf32, #tpu.memory_space<vmem>>, vector<1x8x32xf32>
    %122 = vector.shape_cast %121 : vector<1x8x32xf32> to vector<8x32xf32>
    %cst_94 = arith.constant dense<0.000000e+00> : vector<8x32xf32>
    %123 = tpu.matmul %120, %122, %cst_94 {dimension_numbers = #tpu.dot_dimension_numbers<[1], [0], [0], [1], [0, 0, 1, 1], [], []>} : vector<8x8xf32>, vector<8x32xf32>, vector<8x32xf32> -> vector<8x32xf32>
    %124 = arith.addf %85, %123 : vector<8x32xf32>
    %c3 = arith.constant 3 : index
    %c0_95 = arith.constant 0 : index
    %c0_96 = arith.constant 0 : index
    %125 = vector.load %arg3[%c3, %c0_95, %c0_96] : memref<4x32x8xf32, #tpu.memory_space<vmem>>, vector<1x32x8xf32>
    %126 = vector.shape_cast %125 : vector<1x32x8xf32> to vector<32x8xf32>
    %cst_97 = arith.constant dense<0.000000e+00> : vector<8x8xf32>
    %127 = tpu.matmul %1, %126, %cst_97 {dimension_numbers = #tpu.dot_dimension_numbers<[1], [0], [0], [1], [0, 0, 1, 1], [], []>} : vector<8x32xf32>, vector<32x8xf32>, vector<8x8xf32> -> vector<8x8xf32>
    %c3_98 = arith.constant 3 : index
    %c0_99 = arith.constant 0 : index
    %c0_100 = arith.constant 0 : index
    %128 = vector.load %arg4[%c3_98, %c0_99, %c0_100] : memref<4x1x8xf32, #tpu.memory_space<vmem>>, vector<1x1x8xf32>
    %129 = vector.shape_cast %128 : vector<1x1x8xf32> to vector<1x8xf32>
    %130 = vector.broadcast %129 : vector<1x8xf32> to vector<8x8xf32>
    %131 = arith.addf %127, %130 : vector<8x8xf32>
    %c3_101 = arith.constant 3 : index
    %c0_102 = arith.constant 0 : index
    %c0_103 = arith.constant 0 : index
    %132 = vector.load %arg5[%c3_101, %c0_102, %c0_103] : memref<4x32x8xf32, #tpu.memory_space<vmem>>, vector<1x32x8xf32>
    %133 = vector.shape_cast %132 : vector<1x32x8xf32> to vector<32x8xf32>
    %cst_104 = arith.constant dense<0.000000e+00> : vector<16x8xf32>
    %134 = tpu.matmul %3, %133, %cst_104 {dimension_numbers = #tpu.dot_dimension_numbers<[1], [0], [0], [1], [0, 0, 1, 1], [], []>} : vector<16x32xf32>, vector<32x8xf32>, vector<16x8xf32> -> vector<16x8xf32>
    %c3_105 = arith.constant 3 : index
    %c0_106 = arith.constant 0 : index
    %c0_107 = arith.constant 0 : index
    %135 = vector.load %arg6[%c3_105, %c0_106, %c0_107] : memref<4x1x8xf32, #tpu.memory_space<vmem>>, vector<1x1x8xf32>
    %136 = vector.shape_cast %135 : vector<1x1x8xf32> to vector<1x8xf32>
    %137 = vector.broadcast %136 : vector<1x8xf32> to vector<16x8xf32>
    %138 = arith.addf %134, %137 : vector<16x8xf32>
    %c3_108 = arith.constant 3 : index
    %c0_109 = arith.constant 0 : index
    %c0_110 = arith.constant 0 : index
    %139 = vector.load %arg7[%c3_108, %c0_109, %c0_110] : memref<4x32x8xf32, #tpu.memory_space<vmem>>, vector<1x32x8xf32>
    %140 = vector.shape_cast %139 : vector<1x32x8xf32> to vector<32x8xf32>
    %cst_111 = arith.constant dense<0.000000e+00> : vector<16x8xf32>
    %141 = tpu.matmul %3, %140, %cst_111 {dimension_numbers = #tpu.dot_dimension_numbers<[1], [0], [0], [1], [0, 0, 1, 1], [], []>} : vector<16x32xf32>, vector<32x8xf32>, vector<16x8xf32> -> vector<16x8xf32>
    %c3_112 = arith.constant 3 : index
    %c0_113 = arith.constant 0 : index
    %c0_114 = arith.constant 0 : index
    %142 = vector.load %arg8[%c3_112, %c0_113, %c0_114] : memref<4x1x8xf32, #tpu.memory_space<vmem>>, vector<1x1x8xf32>
    %143 = vector.shape_cast %142 : vector<1x1x8xf32> to vector<1x8xf32>
    %144 = vector.broadcast %143 : vector<1x8xf32> to vector<16x8xf32>
    %145 = arith.addf %141, %144 : vector<16x8xf32>
    %146 = tpu.transpose %138, [1, 0] : vector<16x8xf32> -> vector<8x16xf32>
    %cst_115 = arith.constant dense<0.000000e+00> : vector<8x16xf32>
    %147 = tpu.matmul %131, %146, %cst_115 {dimension_numbers = #tpu.dot_dimension_numbers<[1], [0], [0], [1], [0, 0, 1, 1], [], []>} : vector<8x8xf32>, vector<8x16xf32>, vector<8x16xf32> -> vector<8x16xf32>
    %cst_116 = arith.constant 0.353553385 : f32
    %148 = vector.broadcast %cst_116 : f32 to vector<8x16xf32>
    %149 = arith.mulf %147, %148 : vector<8x16xf32>
    %cst_117 = arith.constant dense<0xFF800000> : vector<8xf32>
    %150 = vector.multi_reduction <maximumf>, %149, %cst_117 [1] : vector<8x16xf32> to vector<8xf32>
    %151 = vector.shape_cast %150 : vector<8xf32> to vector<8x1xf32>
    %152 = vector.broadcast %151 : vector<8x1xf32> to vector<8x16xf32>
    %153 = arith.subf %149, %152 : vector<8x16xf32>
    %154 = math.exp %153 : vector<8x16xf32>
    %cst_118 = arith.constant dense<0.000000e+00> : vector<8xf32>
    %155 = vector.multi_reduction <add>, %154, %cst_118 [1] : vector<8x16xf32> to vector<8xf32>
    %156 = vector.shape_cast %155 : vector<8xf32> to vector<8x1xf32>
    %157 = vector.broadcast %156 : vector<8x1xf32> to vector<8x16xf32>
    %158 = arith.divf %154, %157 : vector<8x16xf32>
    %cst_119 = arith.constant dense<0.000000e+00> : vector<8x8xf32>
    %159 = tpu.matmul %158, %145, %cst_119 {dimension_numbers = #tpu.dot_dimension_numbers<[1], [0], [0], [1], [0, 0, 1, 1], [], []>} : vector<8x16xf32>, vector<16x8xf32>, vector<8x8xf32> -> vector<8x8xf32>
    %c3_120 = arith.constant 3 : index
    %c0_121 = arith.constant 0 : index
    %c0_122 = arith.constant 0 : index
    %160 = vector.load %arg9[%c3_120, %c0_121, %c0_122] : memref<4x8x32xf32, #tpu.memory_space<vmem>>, vector<1x8x32xf32>
    %161 = vector.shape_cast %160 : vector<1x8x32xf32> to vector<8x32xf32>
    %cst_123 = arith.constant dense<0.000000e+00> : vector<8x32xf32>
    %162 = tpu.matmul %159, %161, %cst_123 {dimension_numbers = #tpu.dot_dimension_numbers<[1], [0], [0], [1], [0, 0, 1, 1], [], []>} : vector<8x8xf32>, vector<8x32xf32>, vector<8x32xf32> -> vector<8x32xf32>
    %163 = arith.addf %124, %162 : vector<8x32xf32>
    %c0_124 = arith.constant 0 : index
    %c0_125 = arith.constant 0 : index
    %c0_126 = arith.constant 0 : index
    %164 = vector.load %arg11[%c0_124, %c0_125, %c0_126] : memref<1x8x32xf32, #tpu.memory_space<vmem>>, vector<1x8x32xf32>
    %165 = vector.shape_cast %164 : vector<1x8x32xf32> to vector<8x32xf32>
    %166 = vector.shape_cast %163 : vector<8x32xf32> to vector<1x8x32xf32>
    tpu.vector_store %arg11[%c0_124, %c0_125, %c0_126], %166 {strides = array<i32>} : memref<1x8x32xf32, #tpu.memory_space<vmem>>, vector<1x8x32xf32>,
    return
  }
  func.func @transform_0(%arg0: i32) -> (i32, i32, i32) {
    %c0_i32 = arith.constant 0 : i32
    %c0_i32_0 = arith.constant 0 : i32
    %c0_i32_1 = arith.constant 0 : i32
    return %arg0, %c0_i32, %c0_i32_0 : i32, i32, i32
  }
  func.func @transform_1(%arg0: i32) -> (i32, i32, i32) {
    %c0_i32 = arith.constant 0 : i32
    %c0_i32_0 = arith.constant 0 : i32
    %c0_i32_1 = arith.constant 0 : i32
    return %arg0, %c0_i32, %c0_i32_0 : i32, i32, i32
  }
  func.func @transform_2(%arg0: i32) -> (i32, i32, i32) {
    %c0_i32 = arith.constant 0 : i32
    %c0_i32_0 = arith.constant 0 : i32
    %c0_i32_1 = arith.constant 0 : i32
    %c0_i32_2 = arith.constant 0 : i32
    return %c0_i32, %c0_i32_0, %c0_i32_1 : i32, i32, i32
  }
  func.func @transform_3(%arg0: i32) -> (i32, i32, i32) {
    %c0_i32 = arith.constant 0 : i32
    %c0_i32_0 = arith.constant 0 : i32
    %c0_i32_1 = arith.constant 0 : i32
    %c0_i32_2 = arith.constant 0 : i32
    return %c0_i32, %c0_i32_0, %c0_i32_1 : i32, i32, i32
  }
  func.func @transform_4(%arg0: i32) -> (i32, i32, i32) {
    %c0_i32 = arith.constant 0 : i32
    %c0_i32_0 = arith.constant 0 : i32
    %c0_i32_1 = arith.constant 0 : i32
    %c0_i32_2 = arith.constant 0 : i32
    return %c0_i32, %c0_i32_0, %c0_i32_1 : i32, i32, i32
  }
  func.func @transform_5(%arg0: i32) -> (i32, i32, i32) {
    %c0_i32 = arith.constant 0 : i32
    %c0_i32_0 = arith.constant 0 : i32
    %c0_i32_1 = arith.constant 0 : i32
    %c0_i32_2 = arith.constant 0 : i32
    return %c0_i32, %c0_i32_0, %c0_i32_1 : i32, i32, i32
  }
  func.func @transform_6(%arg0: i32) -> (i32, i32, i32) {
    %c0_i32 = arith.constant 0 : i32
    %c0_i32_0 = arith.constant 0 : i32
    %c0_i32_1 = arith.constant 0 : i32
    %c0_i32_2 = arith.constant 0 : i32
    return %c0_i32, %c0_i32_0, %c0_i32_1 : i32, i32, i32
  }
  func.func @transform_7(%arg0: i32) -> (i32, i32, i32) {
    %c0_i32 = arith.constant 0 : i32
    %c0_i32_0 = arith.constant 0 : i32
    %c0_i32_1 = arith.constant 0 : i32
    %c0_i32_2 = arith.constant 0 : i32
    return %c0_i32, %c0_i32_0, %c0_i32_1 : i32, i32, i32
  }
  func.func @transform_8(%arg0: i32) -> (i32, i32, i32) {
    %c0_i32 = arith.constant 0 : i32
    %c0_i32_0 = arith.constant 0 : i32
    %c0_i32_1 = arith.constant 0 : i32
    %c0_i32_2 = arith.constant 0 : i32
    return %c0_i32, %c0_i32_0, %c0_i32_1 : i32, i32, i32
  }
  func.func @transform_9(%arg0: i32) -> (i32, i32) {
    %c0_i32 = arith.constant 0 : i32
    %c0_i32_0 = arith.constant 0 : i32
    %c0_i32_1 = arith.constant 0 : i32
    return %c0_i32, %c0_i32_0 : i32, i32
  }
  func.func @transform_10(%arg0: i32) -> (i32, i32, i32) {
    %c0_i32 = arith.constant 0 : i32
    %c0_i32_0 = arith.constant 0 : i32
    %c0_i32_1 = arith.constant 0 : i32
    return %arg0, %c0_i32, %c0_i32_0 : i32, i32, i32
  }
}

</mosaic_0001>

<llo_original>
// kernel: cross_attention_forward.1
$region0: #{cross_attention_forward.1}
  #allocation0 [shape = 'u32[]', space=smem, size = 0x4, offset = 0x4, fixed_abs, tag = 'smem constant byte address 0x4 - core index']
  #allocation1 [shape = 'u32[72,128]{1,0:T(1,128)}', space=vmem, size = 0x9000, scoped, tag = 'internal scratch']
  %s0 = inlined_call_operand.vmem [shape: f32[2,8,32], index: 0, kind: input, shape index: {}]
  %s1 = inlined_call_operand.vmem [shape: f32[2,16,32], index: 1, kind: input, shape index: {}]
  %s2 = inlined_call_operand.vmem [shape: f32[4,32,8], index: 2, kind: input, shape index: {}]
  %s3 = inlined_call_operand.vmem [shape: f32[4,1,8], index: 3, kind: input, shape index: {}]
  %s4 = inlined_call_operand.vmem [shape: f32[4,32,8], index: 4, kind: input, shape index: {}]
  %s5 = inlined_call_operand.vmem [shape: f32[4,1,8], index: 5, kind: input, shape index: {}]
  %s6 = inlined_call_operand.vmem [shape: f32[4,32,8], index: 6, kind: input, shape index: {}]
  %s7 = inlined_call_operand.vmem [shape: f32[4,1,8], index: 7, kind: input, shape index: {}]
  %s8 = inlined_call_operand.vmem [shape: f32[4,8,32], index: 8, kind: input, shape index: {}]
  %s9 = inlined_call_operand.vmem [shape: f32[1,32], index: 9, kind: input, shape index: {}]
  %s10 = inlined_call_operand.hbm [shape: f32[2,8,32], index: 10, kind: output, shape index: {}]
  %s11 = sld [smem:[#allocation0]]
  $region73: #{cross_attention_forward.1} parent=0
    _
  %s13 = ssub.s32 1, %s11
  %s14 = scalar_select 0, %s13, %s11
  $region1: #{cross_attention_forward.1} parent=0
    #allocation2 [shape = 'u8[8192]{0}', space=vmem, size = 0x2000, scoped, tag = 'output window, operand 0']
    #allocation3 [shape = 's32[2]{0}', space=sflag, size = 0x8, scoped, tag = 'scoped memory for cross_attention_forward.1']
    %15 = vsyncpa [#allocation3], 0
    %s16 = scalar_lea.sflag [#allocation3], 1
    %17 = vsyncpa %s16, 0
    loop: start=0, step=1, limit=4
    $region2: #{cross_attention_forward.1} parent=1 // loop_pre_header
      _
    $region3: #{cross_attention_forward.1} parent=1 // loop_header
      %s19 = sphi 0, %s23
      %p20 = scmp.ge.s32.totalorder %s19, 4
      %s29 = sphi 0, %s31
      %s32 = sphi 0, %s29
      %s33 = sphi 0, %s32
      %s49 = sphi 0, %s33
      %s55 = sphi 0, %s57
      %s58 = sphi 0, %s55
      %s59 = sphi 0, %s58
      %s75 = sphi 0, %s59
      %s79 = sphi 0, %s79
      %s81 = sphi 0, %s79
      %s82 = sphi 0, %s81
      %s96 = sphi 0, %s82
      %s100 = sphi 0, %s100
      %s102 = sphi 0, %s100
      %s103 = sphi 0, %s102
      %s117 = sphi 0, %s103
      %s121 = sphi 0, %s121
      %s123 = sphi 0, %s121
      %s124 = sphi 0, %s123
      %s138 = sphi 0, %s124
      %s142 = sphi 0, %s142
      %s144 = sphi 0, %s142
      %s145 = sphi 0, %s144
      %s159 = sphi 0, %s145
      %s163 = sphi 0, %s163
      %s165 = sphi 0, %s163
      %s166 = sphi 0, %s165
      %s180 = sphi 0, %s166
      %s184 = sphi 0, %s184
      %s186 = sphi 0, %s184
      %s187 = sphi 0, %s186
      %s201 = sphi 0, %s187
      %s205 = sphi 0, %s205
      %s207 = sphi 0, %s205
      %s208 = sphi 0, %s207
      %s222 = sphi 0, %s208
      %s226 = sphi 0, %s226
      %s228 = sphi 0, %s226
      %s229 = sphi 0, %s228
      %s243 = sphi 0, %s229
      %s249 = sphi 0, %s251
      %s252 = sphi 0, %s249
      %s253 = sphi 0, %s252
      %s269 = sphi 0, %s253
    $region4: #{cross_attention_forward.1} parent=1 // loop_header_branch
      %22 = sbr.rel (%p20) target = $region8
    $region5: #{cross_attention_forward.1} parent=1 // loop_body
      %s24 = ssub.s32 %s19, 1
      %s25 = ssub.s32 %s19, 2
      %s26 = sadd.s32 %s19, 1
      %s27 = ssub.s32 %s19, %s26
      %p28 = scmp.eq.s32.totalorder %s27, 0
      %s30 = sadd.s32 %s29, 1
      %s31 = scalar_select %p28, %s29, %s30
      %p34 = pneg %p28
      %p35 = scmp.eq.s32.totalorder %s19, 1
      %p36 = por %p34, %p35
      %p37 = scmp.ne.s32.totalorder %s29, %s32
      %p38 = scmp.eq.s32.totalorder %s19, 0
      %p39 = por %p37, %p38
      %p40 = scmp.ne.s32.totalorder %s29, %s32
      %p41 = scmp.eq.s32.totalorder %s24, 1
      %p42 = por %p40, %p41
      %p43 = scmp.ne.s32.totalorder %s32, %s33
      %p44 = scmp.eq.s32.totalorder %s24, 0
      %p45 = por %p43, %p44
      %p46 = scmp.ne.s32.totalorder %s32, %s33
      %p47 = scmp.eq.s32.totalorder %s25, 1
      %p48 = por %p46, %p47
      %p50 = scmp.ne.s32.totalorder %s33, %s49
      %p51 = scmp.eq.s32.totalorder %s25, 0
      %p52 = por %p50, %p51
      %s53 = ssub.s32 %s19, %s26
      %p54 = scmp.eq.s32.totalorder %s53, 0
      %s56 = sadd.s32 %s55, 1
      %s57 = scalar_select %p54, %s55, %s56
      %p60 = pneg %p54
      %p61 = scmp.eq.s32.totalorder %s19, 1
      %p62 = por %p60, %p61
      %p63 = scmp.ne.s32.totalorder %s55, %s58
      %p64 = scmp.eq.s32.totalorder %s19, 0
      %p65 = por %p63, %p64
      %p66 = scmp.ne.s32.totalorder %s55, %s58
      %p67 = scmp.eq.s32.totalorder %s24, 1
      %p68 = por %p66, %p67
      %p69 = scmp.ne.s32.totalorder %s58, %s59
      %p70 = scmp.eq.s32.totalorder %s24, 0
      %p71 = por %p69, %p70
      %p72 = scmp.ne.s32.totalorder %s58, %s59
      %p73 = scmp.eq.s32.totalorder %s25, 1
      %p74 = por %p72, %p73
      %p76 = scmp.ne.s32.totalorder %s59, %s75
      %p77 = scmp.eq.s32.totalorder %s25, 0
      %p78 = por %p76, %p77
      %s80 = sadd.s32 %s79, 1
      %p83 = scmp.eq.s32.totalorder %s19, 1
      %p84 = scmp.ne.s32.totalorder %s79, %s81
      %p85 = scmp.eq.s32.totalorder %s19, 0
      %p86 = por %p84, %p85
      %p87 = scmp.ne.s32.totalorder %s79, %s81
      %p88 = scmp.eq.s32.totalorder %s24, 1
      %p89 = por %p87, %p88
      %p90 = scmp.ne.s32.totalorder %s81, %s82
      %p91 = scmp.eq.s32.totalorder %s24, 0
      %p92 = por %p90, %p91
      %p93 = scmp.ne.s32.totalorder %s81, %s82
      %p94 = scmp.eq.s32.totalorder %s25, 1
      %p95 = por %p93, %p94
      %p97 = scmp.ne.s32.totalorder %s82, %s96
      %p98 = scmp.eq.s32.totalorder %s25, 0
      %p99 = por %p97, %p98
      %s101 = sadd.s32 %s100, 1
      %p104 = scmp.eq.s32.totalorder %s19, 1
      %p105 = scmp.ne.s32.totalorder %s100, %s102
      %p106 = scmp.eq.s32.totalorder %s19, 0
      %p107 = por %p105, %p106
      %p108 = scmp.ne.s32.totalorder %s100, %s102
      %p109 = scmp.eq.s32.totalorder %s24, 1
      %p110 = por %p108, %p109
      %p111 = scmp.ne.s32.totalorder %s102, %s103
      %p112 = scmp.eq.s32.totalorder %s24, 0
      %p113 = por %p111, %p112
      %p114 = scmp.ne.s32.totalorder %s102, %s103
      %p115 = scmp.eq.s32.totalorder %s25, 1
      %p116 = por %p114, %p115
      %p118 = scmp.ne.s32.totalorder %s103, %s117
      %p119 = scmp.eq.s32.totalorder %s25, 0
      %p120 = por %p118, %p119
      %s122 = sadd.s32 %s121, 1
      %p125 = scmp.eq.s32.totalorder %s19, 1
      %p126 = scmp.ne.s32.totalorder %s121, %s123
      %p127 = scmp.eq.s32.totalorder %s19, 0
      %p128 = por %p126, %p127
      %p129 = scmp.ne.s32.totalorder %s121, %s123
      %p130 = scmp.eq.s32.totalorder %s24, 1
      %p131 = por %p129, %p130
      %p132 = scmp.ne.s32.totalorder %s123, %s124
      %p133 = scmp.eq.s32.totalorder %s24, 0
      %p134 = por %p132, %p133
      %p135 = scmp.ne.s32.totalorder %s123, %s124
      %p136 = scmp.eq.s32.totalorder %s25, 1
      %p137 = por %p135, %p136
      %p139 = scmp.ne.s32.totalorder %s124, %s138
      %p140 = scmp.eq.s32.totalorder %s25, 0
      %p141 = por %p139, %p140
      %s143 = sadd.s32 %s142, 1
      %p146 = scmp.eq.s32.totalorder %s19, 1
      %p147 = scmp.ne.s32.totalorder %s142, %s144
      %p148 = scmp.eq.s32.totalorder %s19, 0
      %p149 = por %p147, %p148
      %p150 = scmp.ne.s32.totalorder %s142, %s144
      %p151 = scmp.eq.s32.totalorder %s24, 1
      %p152 = por %p150, %p151
      %p153 = scmp.ne.s32.totalorder %s144, %s145
      %p154 = scmp.eq.s32.totalorder %s24, 0
      %p155 = por %p153, %p154
      %p156 = scmp.ne.s32.totalorder %s144, %s145
      %p157 = scmp.eq.s32.totalorder %s25, 1
      %p158 = por %p156, %p157
      %p160 = scmp.ne.s32.totalorder %s145, %s159
      %p161 = scmp.eq.s32.totalorder %s25, 0
      %p162 = por %p160, %p161
      %s164 = sadd.s32 %s163, 1
      %p167 = scmp.eq.s32.totalorder %s19, 1
      %p168 = scmp.ne.s32.totalorder %s163, %s165
      %p169 = scmp.eq.s32.totalorder %s19, 0
      %p170 = por %p168, %p169
      %p171 = scmp.ne.s32.totalorder %s163, %s165
      %p172 = scmp.eq.s32.totalorder %s24, 1
      %p173 = por %p171, %p172
      %p174 = scmp.ne.s32.totalorder %s165, %s166
      %p175 = scmp.eq.s32.totalorder %s24, 0
      %p176 = por %p174, %p175
      %p177 = scmp.ne.s32.totalorder %s165, %s166
      %p178 = scmp.eq.s32.totalorder %s25, 1
      %p179 = por %p177, %p178
      %p181 = scmp.ne.s32.totalorder %s166, %s180
      %p182 = scmp.eq.s32.totalorder %s25, 0
      %p183 = por %p181, %p182
      %s185 = sadd.s32 %s184, 1
      %p188 = scmp.eq.s32.totalorder %s19, 1
      %p189 = scmp.ne.s32.totalorder %s184, %s186
      %p190 = scmp.eq.s32.totalorder %s19, 0
      %p191 = por %p189, %p190
      %p192 = scmp.ne.s32.totalorder %s184, %s186
      %p193 = scmp.eq.s32.totalorder %s24, 1
      %p194 = por %p192, %p193
      %p195 = scmp.ne.s32.totalorder %s186, %s187
      %p196 = scmp.eq.s32.totalorder %s24, 0
      %p197 = por %p195, %p196
      %p198 = scmp.ne.s32.totalorder %s186, %s187
      %p199 = scmp.eq.s32.totalorder %s25, 1
      %p200 = por %p198, %p199
      %p202 = scmp.ne.s32.totalorder %s187, %s201
      %p203 = scmp.eq.s32.totalorder %s25, 0
      %p204 = por %p202, %p203
      %s206 = sadd.s32 %s205, 1
      %p209 = scmp.eq.s32.totalorder %s19, 1
      %p210 = scmp.ne.s32.totalorder %s205, %s207
      %p211 = scmp.eq.s32.totalorder %s19, 0
      %p212 = por %p210, %p211
      %p213 = scmp.ne.s32.totalorder %s205, %s207
      %p214 = scmp.eq.s32.totalorder %s24, 1
      %p215 = por %p213, %p214
      %p216 = scmp.ne.s32.totalorder %s207, %s208
      %p217 = scmp.eq.s32.totalorder %s24, 0
      %p218 = por %p216, %p217
      %p219 = scmp.ne.s32.totalorder %s207, %s208
      %p220 = scmp.eq.s32.totalorder %s25, 1
      %p221 = por %p219, %p220
      %p223 = scmp.ne.s32.totalorder %s208, %s222
      %p224 = scmp.eq.s32.totalorder %s25, 0
      %p225 = por %p223, %p224
      %s227 = sadd.s32 %s226, 1
      %p230 = scmp.eq.s32.totalorder %s19, 1
      %p231 = scmp.ne.s32.totalorder %s226, %s228
      %p232 = scmp.eq.s32.totalorder %s19, 0
      %p233 = por %p231, %p232
      %p234 = scmp.ne.s32.totalorder %s226, %s228
      %p235 = scmp.eq.s32.totalorder %s24, 1
      %p236 = por %p234, %p235
      %p237 = scmp.ne.s32.totalorder %s228, %s229
      %p238 = scmp.eq.s32.totalorder %s24, 0
      %p239 = por %p237, %p238
      %p240 = scmp.ne.s32.totalorder %s228, %s229
      %p241 = scmp.eq.s32.totalorder %s25, 1
      %p242 = por %p240, %p241
      %p244 = scmp.ne.s32.totalorder %s229, %s243
      %p245 = scmp.eq.s32.totalorder %s25, 0
      %p246 = por %p244, %p245
      %s247 = ssub.s32 %s19, %s26
      %p248 = scmp.eq.s32.totalorder %s247, 0
      %s250 = sadd.s32 %s249, 1
      %s251 = scalar_select %p248, %s249, %s250
      %p254 = pneg %p248
      %p255 = scmp.eq.s32.totalorder %s19, 1
      %p256 = por %p254, %p255
      %p257 = scmp.ne.s32.totalorder %s249, %s252
      %p258 = scmp.eq.s32.totalorder %s19, 0
      %p259 = por %p257, %p258
      %p260 = scmp.ne.s32.totalorder %s249, %s252
      %p261 = scmp.eq.s32.totalorder %s24, 1
      %p262 = por %p260, %p261
      %p263 = scmp.ne.s32.totalorder %s252, %s253
      %p264 = scmp.eq.s32.totalorder %s24, 0
      %p265 = por %p263, %p264
      %p266 = scmp.ne.s32.totalorder %s252, %s253
      %p267 = scmp.eq.s32.totalorder %s25, 1
      %p268 = por %p266, %p267
      %p270 = scmp.ne.s32.totalorder %s253, %s269
      %p271 = scmp.eq.s32.totalorder %s25, 0
      %p272 = por %p270, %p271
      %p273 = scmp.le.s32.totalorder 1, %s19
      %p274 = scmp.lt.s32.totalorder %s19, 3
      %p275 = pnand %p273, %p274
      %p276 = pneg %p275
      // Predicated region
      $region9: #{cross_attention_forward.1} parent=5 // pred_check
        _
      $region10: #{cross_attention_forward.1} parent=5 // pred_check_branch
        %278 = sbr.rel (%p275) target = $region12
      $region11: #{cross_attention_forward.1} parent=5 // pred_region
        %s279 = ssub.s32 %s19, 1
        // Predicated region
        $region13: #{cross_attention_forward.1} parent=11 // pred_check
          %p280 = pneg %p92
        $region14: #{cross_attention_forward.1} parent=11 // pred_check_branch
          %282 = sbr.rel (%p280) target = $region16
        $region15: #{cross_attention_forward.1} parent=11 // pred_region
          _
        $region16: #{cross_attention_forward.1} parent=11 // pred_fallthru
          _
        // Predicated region
        $region17: #{cross_attention_forward.1} parent=11 // pred_check
          %p283 = pneg %p113
        $region18: #{cross_attention_forward.1} parent=11 // pred_check_branch
          %285 = sbr.rel (%p283) target = $region20
        $region19: #{cross_attention_forward.1} parent=11 // pred_region
          _
        $region20: #{cross_attention_forward.1} parent=11 // pred_fallthru
          _
        // Predicated region
        $region21: #{cross_attention_forward.1} parent=11 // pred_check
          %p286 = pneg %p134
        $region22: #{cross_attention_forward.1} parent=11 // pred_check_branch
          %288 = sbr.rel (%p286) target = $region24
        $region23: #{cross_attention_forward.1} parent=11 // pred_region
          _
        $region24: #{cross_attention_forward.1} parent=11 // pred_fallthru
          _
        // Predicated region
        $region25: #{cross_attention_forward.1} parent=11 // pred_check
          %p289 = pneg %p155
        $region26: #{cross_attention_forward.1} parent=11 // pred_check_branch
          %291 = sbr.rel (%p289) target = $region28
        $region27: #{cross_attention_forward.1} parent=11 // pred_region
          _
        $region28: #{cross_attention_forward.1} parent=11 // pred_fallthru
          _
        // Predicated region
        $region29: #{cross_attention_forward.1} parent=11 // pred_check
          %p292 = pneg %p176
        $region30: #{cross_attention_forward.1} parent=11 // pred_check_branch
          %294 = sbr.rel (%p292) target = $region32
        $region31: #{cross_attention_forward.1} parent=11 // pred_region
          _
        $region32: #{cross_attention_forward.1} parent=11 // pred_fallthru
          _
        // Predicated region
        $region33: #{cross_attention_forward.1} parent=11 // pred_check
          %p295 = pneg %p197
        $region34: #{cross_attention_forward.1} parent=11 // pred_check_branch
          %297 = sbr.rel (%p295) target = $region36
        $region35: #{cross_attention_forward.1} parent=11 // pred_region
          _
        $region36: #{cross_attention_forward.1} parent=11 // pred_fallthru
          _
        // Predicated region
        $region37: #{cross_attention_forward.1} parent=11 // pred_check
          %p298 = pneg %p218
        $region38: #{cross_attention_forward.1} parent=11 // pred_check_branch
          %300 = sbr.rel (%p298) target = $region40
        $region39: #{cross_attention_forward.1} parent=11 // pred_region
          _
        $region40: #{cross_attention_forward.1} parent=11 // pred_fallthru
          _
        // Predicated region
        $region41: #{cross_attention_forward.1} parent=11 // pred_check
          %p301 = pneg %p239
        $region42: #{cross_attention_forward.1} parent=11 // pred_check_branch
          %303 = sbr.rel (%p301) target = $region44
        $region43: #{cross_attention_forward.1} parent=11 // pred_region
          _
        $region44: #{cross_attention_forward.1} parent=11 // pred_fallthru
          _
      $region12: #{cross_attention_forward.1} parent=5 // pred_fallthru
        _
      %p304 = scmp.lt.s32.totalorder %s19, 2
      // Predicated region
      $region45: #{cross_attention_forward.1} parent=5 // pred_check
        %p305 = pneg %p304
      $region46: #{cross_attention_forward.1} parent=5 // pred_check_branch
        %307 = sbr.rel (%p305) target = $region48
      $region47: #{cross_attention_forward.1} parent=5 // pred_region
        // Predicated region
        $region49: #{cross_attention_forward.1} parent=47 // pred_check
          %p308 = pneg %p39
        $region50: #{cross_attention_forward.1} parent=47 // pred_check_branch
          %310 = sbr.rel (%p308) target = $region52
        $region51: #{cross_attention_forward.1} parent=47 // pred_region
          %p311 = scmp.lt.s32.totalorder %s19, 1
          %s312 = scalar_select %p311, %s19, 1
          %s313 = smul.addr %s312, 8
          %s314 = scalar_lea.vmem %s0, %s313
        $region52: #{cross_attention_forward.1} parent=47 // pred_fallthru
          _
        // Predicated region
        $region53: #{cross_attention_forward.1} parent=47 // pred_check
          %p315 = pneg %p65
        $region54: #{cross_attention_forward.1} parent=47 // pred_check_branch
          %317 = sbr.rel (%p315) target = $region56
        $region55: #{cross_attention_forward.1} parent=47 // pred_region
          %p318 = scmp.lt.s32.totalorder %s19, 1
          %s319 = scalar_select %p318, %s19, 1
          %s320 = smul.addr %s319, 2
          %s321 = smul.addr %s320, 8
          %s322 = scalar_lea.vmem %s1, %s321
        $region56: #{cross_attention_forward.1} parent=47 // pred_fallthru
          _
      $region48: #{cross_attention_forward.1} parent=5 // pred_fallthru
        _
      %p323 = scmp.le.s32.totalorder 1, %s19
      %p324 = scmp.lt.s32.totalorder %s19, 3
      %p325 = pnand %p323, %p324
      %p326 = pneg %p325
      // Predicated region
      $region57: #{cross_attention_forward.1} parent=5 // pred_check
        _
      $region58: #{cross_attention_forward.1} parent=5 // pred_check_branch
        %328 = sbr.rel (%p325) target = $region60
      $region59: #{cross_attention_forward.1} parent=5 // pred_region
        %s329 = ssub.s32 %s19, 1
        %p330 = scmp.lt.s32.totalorder %s24, 1
        %s331 = scalar_select %p330, %s24, 1
        %s332 = smul.addr %s331, 8
        %s333 = scalar_lea.vmem %s0, %s332
        %p334 = pneg %p45
        %p335 = pneg %p42
        %p336 = scmp.lt.s32.totalorder %s24, 1
        %s337 = scalar_select %p336, %s24, 1
        %s338 = smul.addr %s337, 2
        %s339 = smul.addr %s338, 8
        %s340 = scalar_lea.vmem %s1, %s339
        %p341 = pneg %p71
        %p342 = pneg %p68
        %p343 = pneg %p92
        %p344 = pneg %p89
        %p345 = pneg %p113
        %p346 = pneg %p110
        %p347 = pneg %p134
        %p348 = pneg %p131
        %p349 = pneg %p155
        %p350 = pneg %p152
        %p351 = pneg %p176
        %p352 = pneg %p173
        %p353 = pneg %p197
        %p354 = pneg %p194
        %p355 = pneg %p218
        %p356 = pneg %p215
        %p357 = pneg %p239
        %p358 = pneg %p236
        %p359 = pneg %p265
        %p360 = pneg %p262
        %s361 = sand.u32 %s252, 1
        %s362 = scalar_lea.sflag [#allocation3], %s361
        %s363 = sand.u32 %s252, 1
        %s364 = smul.addr %s363, 8
        %s365 = scalar_lea.vmem [#allocation2], %s364
        %p366 = scmp.lt.s32.totalorder %s24, 1
        %s367 = scalar_select %p366, %s24, 1
        %s368 = smul.addr %s367, 8
        %s369 = scalar_lea.vmem %s0, %s368
        %p370 = scmp.lt.s32.totalorder %s24, 1
        %s371 = scalar_select %p370, %s24, 1
        %s372 = smul.addr %s371, 2
        %s373 = smul.addr %s372, 8
        %s374 = scalar_lea.vmem %s1, %s373
        %v375 = vld [vmem:[%s369] sm:$0xff]
        %v376 = vld [vmem:[%s374] sm:$0xff]
        %v377 = vld [vmem:[%s374 + $0x8] sm:$0xff]
        %v378 = vld [vmem:[%s9] sm:$0x1]
        %v380 = vperm.slane %v378, 0
        %v382 = vadd.f32 %v380, 0.0
        %v383 = vld [vmem:[%s2] sm:$0xff]
        %v384 = vld [vmem:[%s2 + $0x8] sm:$0xff]
        %v385 = vld [vmem:[%s2 + $0x10] sm:$0xff]
        %v386 = vld [vmem:[%s2 + $0x18] sm:$0xff]
        %v387 = vld [vmem:[%s3] sm:$0x1]
        %v389 = vperm.slane %v387, 0
        %vm391 = vcmask 261120
        %v393 = vsel %vm391, %v375, 0
        %395 = vmatpush.msra.mxu0 0.0
        %396 = vmatpush.msra.mxu0 0.0
        %397 = vmatpush.msra.mxu0 0.0
        %398 = vmatpush.msra.mxu0 0.0
        %399 = vmatpush.msra.mxu0 0.0
        %400 = vmatpush.msra.mxu0 0.0
        %401 = vmatpush.msra.mxu0 0.0
        %402 = vmatpush.msra.mxu0 0.0
        %403 = vmatpush.msra.mxu0 0.0
        %404 = vmatpush.msra.mxu0 0.0
        %405 = vmatpush.msra.mxu0 0.0
        %406 = vmatpush.msra.mxu0 0.0
        %407 = vmatpush.msra.mxu0 %v386
        %408 = vmatpush.msra.mxu0 %v385
        %409 = vmatpush.msra.mxu0 %v384
        %410 = vmatpush.msra.mxu0 %v383
        %411 = vmatmul.f32.gmra.mxu0 %v393
        %v412 = vpop.f32.mrf.mxu0
        %v413 = vadd.f32 %v389, %v412
        %414 = vdwg.mxu0
        %v415 = vld [vmem:[%s4] sm:$0xff]
        %v416 = vld [vmem:[%s4 + $0x8] sm:$0xff]
        %v417 = vld [vmem:[%s4 + $0x10] sm:$0xff]
        %v418 = vld [vmem:[%s4 + $0x18] sm:$0xff]
        %v419 = vld [vmem:[%s5] sm:$0x1]
        %v421 = vperm.slane %v419, 0
        %v424 = vsel %vm391, %v376, 0
        %v427 = vsel %vm391, %v377, 0
        %429 = vmatpush.msra.mxu0 0.0
        %430 = vmatpush.msra.mxu0 0.0
        %431 = vmatpush.msra.mxu0 0.0
        %432 = vmatpush.msra.mxu0 0.0
        %433 = vmatpush.msra.mxu0 0.0
        %434 = vmatpush.msra.mxu0 0.0
        %435 = vmatpush.msra.mxu0 0.0
        %436 = vmatpush.msra.mxu0 0.0
        %437 = vmatpush.msra.mxu0 0.0
        %438 = vmatpush.msra.mxu0 0.0
        %439 = vmatpush.msra.mxu0 0.0
        %440 = vmatpush.msra.mxu0 0.0
        %441 = vmatpush.msra.mxu0 %v418
        %442 = vmatpush.msra.mxu0 %v417
        %443 = vmatpush.msra.mxu0 %v416
        %444 = vmatpush.msra.mxu0 %v415
        %445 = vmatmul.f32.gmra.mxu0 %v424
        %v446 = vpop.f32.mrf.mxu0
        %v447 = vadd.f32 %v421, %v446
        %448 = vmatmul.f32.gmra.mxu0 %v427
        %v449 = vpop.f32.mrf.mxu0
        %v450 = vadd.f32 %v421, %v449
        %451 = vdwg.mxu0
        %v452 = vld [vmem:[%s6] sm:$0xff]
        %v453 = vld [vmem:[%s6 + $0x8] sm:$0xff]
        %v454 = vld [vmem:[%s6 + $0x10] sm:$0xff]
        %v455 = vld [vmem:[%s6 + $0x18] sm:$0xff]
        %v456 = vld [vmem:[%s7] sm:$0x1]
        %v458 = vperm.slane %v456, 0
        %460 = vmatpush.msra.mxu0 0.0
        %461 = vmatpush.msra.mxu0 0.0
        %462 = vmatpush.msra.mxu0 0.0
        %463 = vmatpush.msra.mxu0 0.0
        %464 = vmatpush.msra.mxu0 0.0
        %465 = vmatpush.msra.mxu0 0.0
        %466 = vmatpush.msra.mxu0 0.0
        %467 = vmatpush.msra.mxu0 0.0
        %468 = vmatpush.msra.mxu0 0.0
        %469 = vmatpush.msra.mxu0 0.0
        %470 = vmatpush.msra.mxu0 0.0
        %471 = vmatpush.msra.mxu0 0.0
        %472 = vmatpush.msra.mxu0 %v455
        %473 = vmatpush.msra.mxu0 %v454
        %474 = vmatpush.msra.mxu0 %v453
        %475 = vmatpush.msra.mxu0 %v452
        %476 = vmatmul.f32.gmra.mxu0 %v424
        %v477 = vpop.f32.mrf.mxu0
        %v478 = vadd.f32 %v458, %v477
        %479 = vmatmul.f32.gmra.mxu0 %v427
        %v480 = vpop.f32.mrf.mxu0
        %v481 = vadd.f32 %v458, %v480
        %482 = vdwg.mxu0
        %vm483 = vcmask 64512
        %v485 = vsel %vm483, %v413, 0
        %v488 = vsel %vm483, %v447, 0
        %v491 = vsel %vm483, %v450, 0
        %493 = vmatpush.xpose.msra.mxu0 0.0
        %494 = vmatpush.xpose.msra.mxu0 0.0
        %495 = vmatpush.xpose.msra.mxu0 0.0
        %496 = vmatpush.xpose.msra.mxu0 0.0
        %497 = vmatpush.xpose.msra.mxu0 0.0
        %498 = vmatpush.xpose.msra.mxu0 0.0
        %499 = vmatpush.xpose.msra.mxu0 0.0
        %500 = vmatpush.xpose.msra.mxu0 0.0
        %501 = vmatpush.xpose.msra.mxu0 0.0
        %502 = vmatpush.xpose.msra.mxu0 0.0
        %503 = vmatpush.xpose.msra.mxu0 0.0
        %504 = vmatpush.xpose.msra.mxu0 0.0
        %505 = vmatpush.xpose.msra.mxu0 0.0
        %506 = vmatpush.xpose.msra.mxu0 0.0
        %507 = vmatpush.xpose.msra.mxu0 %v491
        %508 = vmatpush.xpose.msra.mxu0 %v488
        %509 = vmatmul.f32.gmra.mxu0 %v485
        %v510 = vpop.f32.mrf.mxu0
        %v511 = vadd.f32 0.0, %v510
        %512 = vdwg.mxu0
        %v513 = vmul.f32 %v511, 0.35355338
        %vm514 = vcmask 130048
        %v515 = vsel %vm514, %v513, -inf
        %516 = vmax.xlane.f32.xlu0 %v515
        %v517 = vpop.xlane.xlu0 %516
        %v518 = vsub.f32 %v513, %v517
        %v519 = vmul.f32 %v518, 1.442695
        %v520 = vpow.pop %v519
        %v521 = vsel %vm514, %v520, 0.0
        %522 = vadd.xlane.f32.xlu0 %v521
        %v523 = vpop.xlane.xlu0 %522
        %v524 = vrcp.pop %v523
        %v525 = vmul.f32 %v523, %v524
        %v526 = vsub.f32 1.0, %v525
        %v527 = vmul.f32 %v524, %v526
        %v528 = vadd.f32 %v524, %v527
        %vm529 = vweird.f32 %v523
        %vm530 = vweird.f32 %v524
        %vm531 = vmor %vm529, %vm530
        %v532 = vsel %vm531, %v524, %v528
        %v533 = vand.u32 2147483647, %v523
        %vm534 = vcmp.eq.f32.partialorder %v533, 8.507059e+37
        %v535 = vand.u32 %v523, 2147483648
        %v536 = vor.u32 1.1754944e-38, %v535
        %v537 = vsel %vm534, %v536, %v532
        %v538 = vmul.f32 %v520, %v537
        %v540 = vsel %vm514, %v538, 0
        %542 = vmatpush.msra.mxu0 0.0
        %543 = vmatpush.msra.mxu0 0.0
        %544 = vmatpush.msra.mxu0 0.0
        %545 = vmatpush.msra.mxu0 0.0
        %546 = vmatpush.msra.mxu0 0.0
        %547 = vmatpush.msra.mxu0 0.0
        %548 = vmatpush.msra.mxu0 0.0
        %549 = vmatpush.msra.mxu0 0.0
        %550 = vmatpush.msra.mxu0 0.0
        %551 = vmatpush.msra.mxu0 0.0
        %552 = vmatpush.msra.mxu0 0.0
        %553 = vmatpush.msra.mxu0 0.0
        %554 = vmatpush.msra.mxu0 0.0
        %555 = vmatpush.msra.mxu0 0.0
        %556 = vmatpush.msra.mxu0 %v481
        %557 = vmatpush.msra.mxu0 %v478
        %558 = vmatmul.f32.gmra.mxu0 %v540
        %v559 = vpop.f32.mrf.mxu0
        %v560 = vadd.f32 0.0, %v559
        %561 = vdwg.mxu0
        %v562 = vld [vmem:[%s8] sm:$0xff]
        %v564 = vsel %vm483, %v560, 0
        %566 = vmatpush.msra.mxu0 0.0
        %567 = vmatpush.msra.mxu0 0.0
        %568 = vmatpush.msra.mxu0 0.0
        %569 = vmatpush.msra.mxu0 0.0
        %570 = vmatpush.msra.mxu0 0.0
        %571 = vmatpush.msra.mxu0 0.0
        %572 = vmatpush.msra.mxu0 0.0
        %573 = vmatpush.msra.mxu0 0.0
        %574 = vmatpush.msra.mxu0 0.0
        %575 = vmatpush.msra.mxu0 0.0
        %576 = vmatpush.msra.mxu0 0.0
        %577 = vmatpush.msra.mxu0 0.0
        %578 = vmatpush.msra.mxu0 0.0
        %579 = vmatpush.msra.mxu0 0.0
        %580 = vmatpush.msra.mxu0 0.0
        %581 = vmatpush.msra.mxu0 %v562
        %582 = vmatmul.f32.gmra.mxu0 %v564
        %v583 = vpop.f32.mrf.mxu0
        %v584 = vadd.f32 0.0, %v583
        %585 = vdwg.mxu0
        %v586 = vadd.f32 %v382, %v584
        %s587 = scalar_lea.vmem %s2, 32
        %v588 = vld [vmem:[%s587] sm:$0xff]
        %v589 = vld [vmem:[%s587 + $0x8] sm:$0xff]
        %v590 = vld [vmem:[%s587 + $0x10] sm:$0xff]
        %v591 = vld [vmem:[%s587 + $0x18] sm:$0xff]
        %s592 = scalar_lea.vmem %s3, 1
        %v593 = vld [vmem:[%s592] sm:$0x1]
        %v595 = vperm.slane %v593, 0
        %597 = vmatpush.msra.mxu0 0.0
        %598 = vmatpush.msra.mxu0 0.0
        %599 = vmatpush.msra.mxu0 0.0
        %600 = vmatpush.msra.mxu0 0.0
        %601 = vmatpush.msra.mxu0 0.0
        %602 = vmatpush.msra.mxu0 0.0
        %603 = vmatpush.msra.mxu0 0.0
        %604 = vmatpush.msra.mxu0 0.0
        %605 = vmatpush.msra.mxu0 0.0
        %606 = vmatpush.msra.mxu0 0.0
        %607 = vmatpush.msra.mxu0 0.0
        %608 = vmatpush.msra.mxu0 0.0
        %609 = vmatpush.msra.mxu0 %v591
        %610 = vmatpush.msra.mxu0 %v590
        %611 = vmatpush.msra.mxu0 %v589
        %612 = vmatpush.msra.mxu0 %v588
        %613 = vmatmul.f32.gmra.mxu0 %v393
        %v614 = vpop.f32.mrf.mxu0
        %v615 = vadd.f32 %v595, %v614
        %616 = vdwg.mxu0
        %s617 = scalar_lea.vmem %s4, 32
        %v618 = vld [vmem:[%s617] sm:$0xff]
        %v619 = vld [vmem:[%s617 + $0x8] sm:$0xff]
        %v620 = vld [vmem:[%s617 + $0x10] sm:$0xff]
        %v621 = vld [vmem:[%s617 + $0x18] sm:$0xff]
        %s622 = scalar_lea.vmem %s5, 1
        %v623 = vld [vmem:[%s622] sm:$0x1]
        %v625 = vperm.slane %v623, 0
        %627 = vmatpush.msra.mxu0 0.0
        %628 = vmatpush.msra.mxu0 0.0
        %629 = vmatpush.msra.mxu0 0.0
        %630 = vmatpush.msra.mxu0 0.0
        %631 = vmatpush.msra.mxu0 0.0
        %632 = vmatpush.msra.mxu0 0.0
        %633 = vmatpush.msra.mxu0 0.0
        %634 = vmatpush.msra.mxu0 0.0
        %635 = vmatpush.msra.mxu0 0.0
        %636 = vmatpush.msra.mxu0 0.0
        %637 = vmatpush.msra.mxu0 0.0
        %638 = vmatpush.msra.mxu0 0.0
        %639 = vmatpush.msra.mxu0 %v621
        %640 = vmatpush.msra.mxu0 %v620
        %641 = vmatpush.msra.mxu0 %v619
        %642 = vmatpush.msra.mxu0 %v618
        %643 = vmatmul.f32.gmra.mxu0 %v424
        %v644 = vpop.f32.mrf.mxu0
        %v645 = vadd.f32 %v625, %v644
        %646 = vmatmul.f32.gmra.mxu0 %v427
        %v647 = vpop.f32.mrf.mxu0
        %v648 = vadd.f32 %v625, %v647
        %649 = vdwg.mxu0
        %s650 = scalar_lea.vmem %s6, 32
        %v651 = vld [vmem:[%s650] sm:$0xff]
        %v652 = vld [vmem:[%s650 + $0x8] sm:$0xff]
        %v653 = vld [vmem:[%s650 + $0x10] sm:$0xff]
        %v654 = vld [vmem:[%s650 + $0x18] sm:$0xff]
        %s655 = scalar_lea.vmem %s7, 1
        %v656 = vld [vmem:[%s655] sm:$0x1]
        %v658 = vperm.slane %v656, 0
        %660 = vmatpush.msra.mxu0 0.0
        %661 = vmatpush.msra.mxu0 0.0
        %662 = vmatpush.msra.mxu0 0.0
        %663 = vmatpush.msra.mxu0 0.0
        %664 = vmatpush.msra.mxu0 0.0
        %665 = vmatpush.msra.mxu0 0.0
        %666 = vmatpush.msra.mxu0 0.0
        %667 = vmatpush.msra.mxu0 0.0
        %668 = vmatpush.msra.mxu0 0.0
        %669 = vmatpush.msra.mxu0 0.0
        %670 = vmatpush.msra.mxu0 0.0
        %671 = vmatpush.msra.mxu0 0.0
        %672 = vmatpush.msra.mxu0 %v654
        %673 = vmatpush.msra.mxu0 %v653
        %674 = vmatpush.msra.mxu0 %v652
        %675 = vmatpush.msra.mxu0 %v651
        %676 = vmatmul.f32.gmra.mxu0 %v424
        %v677 = vpop.f32.mrf.mxu0
        %v678 = vadd.f32 %v658, %v677
        %679 = vmatmul.f32.gmra.mxu0 %v427
        %v680 = vpop.f32.mrf.mxu0
        %v681 = vadd.f32 %v658, %v680
        %682 = vdwg.mxu0
        %v684 = vsel %vm483, %v615, 0
        %v687 = vsel %vm483, %v645, 0
        %v690 = vsel %vm483, %v648, 0
        %692 = vmatpush.xpose.msra.mxu0 0.0
        %693 = vmatpush.xpose.msra.mxu0 0.0
        %694 = vmatpush.xpose.msra.mxu0 0.0
        %695 = vmatpush.xpose.msra.mxu0 0.0
        %696 = vmatpush.xpose.msra.mxu0 0.0
        %697 = vmatpush.xpose.msra.mxu0 0.0
        %698 = vmatpush.xpose.msra.mxu0 0.0
        %699 = vmatpush.xpose.msra.mxu0 0.0
        %700 = vmatpush.xpose.msra.mxu0 0.0
        %701 = vmatpush.xpose.msra.mxu0 0.0
        %702 = vmatpush.xpose.msra.mxu0 0.0
        %703 = vmatpush.xpose.msra.mxu0 0.0
        %704 = vmatpush.xpose.msra.mxu0 0.0
        %705 = vmatpush.xpose.msra.mxu0 0.0
        %706 = vmatpush.xpose.msra.mxu0 %v690
        %707 = vmatpush.xpose.msra.mxu0 %v687
        %708 = vmatmul.f32.gmra.mxu0 %v684
        %v709 = vpop.f32.mrf.mxu0
        %v710 = vadd.f32 0.0, %v709
        %711 = vdwg.mxu0
        %v712 = vmul.f32 %v710, 0.35355338
        %v713 = vsel %vm514, %v712, -inf
        %714 = vmax.xlane.f32.xlu0 %v713
        %v715 = vpop.xlane.xlu0 %714
        %v716 = vsub.f32 %v712, %v715
        %v717 = vmul.f32 %v716, 1.442695
        %v718 = vpow.pop %v717
        %v719 = vsel %vm514, %v718, 0.0
        %720 = vadd.xlane.f32.xlu0 %v719
        %v721 = vpop.xlane.xlu0 %720
        %v722 = vrcp.pop %v721
        %v723 = vmul.f32 %v721, %v722
        %v724 = vsub.f32 1.0, %v723
        %v725 = vmul.f32 %v722, %v724
        %v726 = vadd.f32 %v722, %v725
        %vm727 = vweird.f32 %v721
        %vm728 = vweird.f32 %v722
        %vm729 = vmor %vm727, %vm728
        %v730 = vsel %vm729, %v722, %v726
        %v731 = vand.u32 2147483647, %v721
        %vm732 = vcmp.eq.f32.partialorder %v731, 8.507059e+37
        %v733 = vand.u32 %v721, 2147483648
        %v734 = vor.u32 1.1754944e-38, %v733
        %v735 = vsel %vm732, %v734, %v730
        %v736 = vmul.f32 %v718, %v735
        %v738 = vsel %vm514, %v736, 0
        %740 = vmatpush.msra.mxu0 0.0
        %741 = vmatpush.msra.mxu0 0.0
        %742 = vmatpush.msra.mxu0 0.0
        %743 = vmatpush.msra.mxu0 0.0
        %744 = vmatpush.msra.mxu0 0.0
        %745 = vmatpush.msra.mxu0 0.0
        %746 = vmatpush.msra.mxu0 0.0
        %747 = vmatpush.msra.mxu0 0.0
        %748 = vmatpush.msra.mxu0 0.0
        %749 = vmatpush.msra.mxu0 0.0
        %750 = vmatpush.msra.mxu0 0.0
        %751 = vmatpush.msra.mxu0 0.0
        %752 = vmatpush.msra.mxu0 0.0
        %753 = vmatpush.msra.mxu0 0.0
        %754 = vmatpush.msra.mxu0 %v681
        %755 = vmatpush.msra.mxu0 %v678
        %756 = vmatmul.f32.gmra.mxu0 %v738
        %v757 = vpop.f32.mrf.mxu0
        %v758 = vadd.f32 0.0, %v757
        %759 = vdwg.mxu0
        %s760 = scalar_lea.vmem %s8, 8
        %v761 = vld [vmem:[%s760] sm:$0xff]
        %v763 = vsel %vm483, %v758, 0
        %765 = vmatpush.msra.mxu0 0.0
        %766 = vmatpush.msra.mxu0 0.0
        %767 = vmatpush.msra.mxu0 0.0
        %768 = vmatpush.msra.mxu0 0.0
        %769 = vmatpush.msra.mxu0 0.0
        %770 = vmatpush.msra.mxu0 0.0
        %771 = vmatpush.msra.mxu0 0.0
        %772 = vmatpush.msra.mxu0 0.0
        %773 = vmatpush.msra.mxu0 0.0
        %774 = vmatpush.msra.mxu0 0.0
        %775 = vmatpush.msra.mxu0 0.0
        %776 = vmatpush.msra.mxu0 0.0
        %777 = vmatpush.msra.mxu0 0.0
        %778 = vmatpush.msra.mxu0 0.0
        %779 = vmatpush.msra.mxu0 0.0
        %780 = vmatpush.msra.mxu0 %v761
        %781 = vmatmul.f32.gmra.mxu0 %v763
        %v782 = vpop.f32.mrf.mxu0
        %v783 = vadd.f32 0.0, %v782
        %784 = vdwg.mxu0
        %v785 = vadd.f32 %v586, %v783
        %s786 = scalar_lea.vmem %s2, 64
        %v787 = vld [vmem:[%s786] sm:$0xff]
        %v788 = vld [vmem:[%s786 + $0x8] sm:$0xff]
        %v789 = vld [vmem:[%s786 + $0x10] sm:$0xff]
        %v790 = vld [vmem:[%s786 + $0x18] sm:$0xff]
        %s791 = scalar_lea.vmem %s3, 2
        %v792 = vld [vmem:[%s791] sm:$0x1]
        %v794 = vperm.slane %v792, 0
        %796 = vmatpush.msra.mxu0 0.0
        %797 = vmatpush.msra.mxu0 0.0
        %798 = vmatpush.msra.mxu0 0.0
        %799 = vmatpush.msra.mxu0 0.0
        %800 = vmatpush.msra.mxu0 0.0
        %801 = vmatpush.msra.mxu0 0.0
        %802 = vmatpush.msra.mxu0 0.0
        %803 = vmatpush.msra.mxu0 0.0
        %804 = vmatpush.msra.mxu0 0.0
        %805 = vmatpush.msra.mxu0 0.0
        %806 = vmatpush.msra.mxu0 0.0
        %807 = vmatpush.msra.mxu0 0.0
        %808 = vmatpush.msra.mxu0 %v790
        %809 = vmatpush.msra.mxu0 %v789
        %810 = vmatpush.msra.mxu0 %v788
        %811 = vmatpush.msra.mxu0 %v787
        %812 = vmatmul.f32.gmra.mxu0 %v393
        %v813 = vpop.f32.mrf.mxu0
        %v814 = vadd.f32 %v794, %v813
        %815 = vdwg.mxu0
        %s816 = scalar_lea.vmem %s4, 64
        %v817 = vld [vmem:[%s816] sm:$0xff]
        %v818 = vld [vmem:[%s816 + $0x8] sm:$0xff]
        %v819 = vld [vmem:[%s816 + $0x10] sm:$0xff]
        %v820 = vld [vmem:[%s816 + $0x18] sm:$0xff]
        %s821 = scalar_lea.vmem %s5, 2
        %v822 = vld [vmem:[%s821] sm:$0x1]
        %v824 = vperm.slane %v822, 0
        %826 = vmatpush.msra.mxu0 0.0
        %827 = vmatpush.msra.mxu0 0.0
        %828 = vmatpush.msra.mxu0 0.0
        %829 = vmatpush.msra.mxu0 0.0
        %830 = vmatpush.msra.mxu0 0.0
        %831 = vmatpush.msra.mxu0 0.0
        %832 = vmatpush.msra.mxu0 0.0
        %833 = vmatpush.msra.mxu0 0.0
        %834 = vmatpush.msra.mxu0 0.0
        %835 = vmatpush.msra.mxu0 0.0
        %836 = vmatpush.msra.mxu0 0.0
        %837 = vmatpush.msra.mxu0 0.0
        %838 = vmatpush.msra.mxu0 %v820
        %839 = vmatpush.msra.mxu0 %v819
        %840 = vmatpush.msra.mxu0 %v818
        %841 = vmatpush.msra.mxu0 %v817
        %842 = vmatmul.f32.gmra.mxu0 %v424
        %v843 = vpop.f32.mrf.mxu0
        %v844 = vadd.f32 %v824, %v843
        %845 = vmatmul.f32.gmra.mxu0 %v427
        %v846 = vpop.f32.mrf.mxu0
        %v847 = vadd.f32 %v824, %v846
        %848 = vdwg.mxu0
        %s849 = scalar_lea.vmem %s6, 64
        %v850 = vld [vmem:[%s849] sm:$0xff]
        %v851 = vld [vmem:[%s849 + $0x8] sm:$0xff]
        %v852 = vld [vmem:[%s849 + $0x10] sm:$0xff]
        %v853 = vld [vmem:[%s849 + $0x18] sm:$0xff]
        %s854 = scalar_lea.vmem %s7, 2
        %v855 = vld [vmem:[%s854] sm:$0x1]
        %v857 = vperm.slane %v855, 0
        %859 = vmatpush.msra.mxu0 0.0
        %860 = vmatpush.msra.mxu0 0.0
        %861 = vmatpush.msra.mxu0 0.0
        %862 = vmatpush.msra.mxu0 0.0
        %863 = vmatpush.msra.mxu0 0.0
        %864 = vmatpush.msra.mxu0 0.0
        %865 = vmatpush.msra.mxu0 0.0
        %866 = vmatpush.msra.mxu0 0.0
        %867 = vmatpush.msra.mxu0 0.0
        %868 = vmatpush.msra.mxu0 0.0
        %869 = vmatpush.msra.mxu0 0.0
        %870 = vmatpush.msra.mxu0 0.0
        %871 = vmatpush.msra.mxu0 %v853
        %872 = vmatpush.msra.mxu0 %v852
        %873 = vmatpush.msra.mxu0 %v851
        %874 = vmatpush.msra.mxu0 %v850
        %875 = vmatmul.f32.gmra.mxu0 %v424
        %v876 = vpop.f32.mrf.mxu0
        %v877 = vadd.f32 %v857, %v876
        %878 = vmatmul.f32.gmra.mxu0 %v427
        %v879 = vpop.f32.mrf.mxu0
        %v880 = vadd.f32 %v857, %v879
        %881 = vdwg.mxu0
        %v883 = vsel %vm483, %v814, 0
        %v886 = vsel %vm483, %v844, 0
        %v889 = vsel %vm483, %v847, 0
        %891 = vmatpush.xpose.msra.mxu0 0.0
        %892 = vmatpush.xpose.msra.mxu0 0.0
        %893 = vmatpush.xpose.msra.mxu0 0.0
        %894 = vmatpush.xpose.msra.mxu0 0.0
        %895 = vmatpush.xpose.msra.mxu0 0.0
        %896 = vmatpush.xpose.msra.mxu0 0.0
        %897 = vmatpush.xpose.msra.mxu0 0.0
        %898 = vmatpush.xpose.msra.mxu0 0.0
        %899 = vmatpush.xpose.msra.mxu0 0.0
        %900 = vmatpush.xpose.msra.mxu0 0.0
        %901 = vmatpush.xpose.msra.mxu0 0.0
        %902 = vmatpush.xpose.msra.mxu0 0.0
        %903 = vmatpush.xpose.msra.mxu0 0.0
        %904 = vmatpush.xpose.msra.mxu0 0.0
        %905 = vmatpush.xpose.msra.mxu0 %v889
        %906 = vmatpush.xpose.msra.mxu0 %v886
        %907 = vmatmul.f32.gmra.mxu0 %v883
        %v908 = vpop.f32.mrf.mxu0
        %v909 = vadd.f32 0.0, %v908
        %910 = vdwg.mxu0
        %v911 = vmul.f32 %v909, 0.35355338
        %v912 = vsel %vm514, %v911, -inf
        %913 = vmax.xlane.f32.xlu0 %v912
        %v914 = vpop.xlane.xlu0 %913
        %v915 = vsub.f32 %v911, %v914
        %v916 = vmul.f32 %v915, 1.442695
        %v917 = vpow.pop %v916
        %v918 = vsel %vm514, %v917, 0.0
        %919 = vadd.xlane.f32.xlu0 %v918
        %v920 = vpop.xlane.xlu0 %919
        %v921 = vrcp.pop %v920
        %v922 = vmul.f32 %v920, %v921
        %v923 = vsub.f32 1.0, %v922
        %v924 = vmul.f32 %v921, %v923
        %v925 = vadd.f32 %v921, %v924
        %vm926 = vweird.f32 %v920
        %vm927 = vweird.f32 %v921
        %vm928 = vmor %vm926, %vm927
        %v929 = vsel %vm928, %v921, %v925
        %v930 = vand.u32 2147483647, %v920
        %vm931 = vcmp.eq.f32.partialorder %v930, 8.507059e+37
        %v932 = vand.u32 %v920, 2147483648
        %v933 = vor.u32 1.1754944e-38, %v932
        %v934 = vsel %vm931, %v933, %v929
        %v935 = vmul.f32 %v917, %v934
        %v937 = vsel %vm514, %v935, 0
        %939 = vmatpush.msra.mxu0 0.0
        %940 = vmatpush.msra.mxu0 0.0
        %941 = vmatpush.msra.mxu0 0.0
        %942 = vmatpush.msra.mxu0 0.0
        %943 = vmatpush.msra.mxu0 0.0
        %944 = vmatpush.msra.mxu0 0.0
        %945 = vmatpush.msra.mxu0 0.0
        %946 = vmatpush.msra.mxu0 0.0
        %947 = vmatpush.msra.mxu0 0.0
        %948 = vmatpush.msra.mxu0 0.0
        %949 = vmatpush.msra.mxu0 0.0
        %950 = vmatpush.msra.mxu0 0.0
        %951 = vmatpush.msra.mxu0 0.0
        %952 = vmatpush.msra.mxu0 0.0
        %953 = vmatpush.msra.mxu0 %v880
        %954 = vmatpush.msra.mxu0 %v877
        %955 = vmatmul.f32.gmra.mxu0 %v937
        %v956 = vpop.f32.mrf.mxu0
        %v957 = vadd.f32 0.0, %v956
        %958 = vdwg.mxu0
        %s959 = scalar_lea.vmem %s8, 16
        %v960 = vld [vmem:[%s959] sm:$0xff]
        %v962 = vsel %vm483, %v957, 0
        %964 = vmatpush.msra.mxu0 0.0
        %965 = vmatpush.msra.mxu0 0.0
        %966 = vmatpush.msra.mxu0 0.0
        %967 = vmatpush.msra.mxu0 0.0
        %968 = vmatpush.msra.mxu0 0.0
        %969 = vmatpush.msra.mxu0 0.0
        %970 = vmatpush.msra.mxu0 0.0
        %971 = vmatpush.msra.mxu0 0.0
        %972 = vmatpush.msra.mxu0 0.0
        %973 = vmatpush.msra.mxu0 0.0
        %974 = vmatpush.msra.mxu0 0.0
        %975 = vmatpush.msra.mxu0 0.0
        %976 = vmatpush.msra.mxu0 0.0
        %977 = vmatpush.msra.mxu0 0.0
        %978 = vmatpush.msra.mxu0 0.0
        %979 = vmatpush.msra.mxu0 %v960
        %980 = vmatmul.f32.gmra.mxu0 %v962
        %v981 = vpop.f32.mrf.mxu0
        %v982 = vadd.f32 0.0, %v981
        %983 = vdwg.mxu0
        %v984 = vadd.f32 %v785, %v982
        %s985 = scalar_lea.vmem %s2, 96
        %v986 = vld [vmem:[%s985] sm:$0xff]
        %v987 = vld [vmem:[%s985 + $0x8] sm:$0xff]
        %v988 = vld [vmem:[%s985 + $0x10] sm:$0xff]
        %v989 = vld [vmem:[%s985 + $0x18] sm:$0xff]
        %s990 = scalar_lea.vmem %s3, 3
        %v991 = vld [vmem:[%s990] sm:$0x1]
        %v993 = vperm.slane %v991, 0
        %995 = vmatpush.msra.mxu0 0.0
        %996 = vmatpush.msra.mxu0 0.0
        %997 = vmatpush.msra.mxu0 0.0
        %998 = vmatpush.msra.mxu0 0.0
        %999 = vmatpush.msra.mxu0 0.0
        %1000 = vmatpush.msra.mxu0 0.0
        %1001 = vmatpush.msra.mxu0 0.0
        %1002 = vmatpush.msra.mxu0 0.0
        %1003 = vmatpush.msra.mxu0 0.0
        %1004 = vmatpush.msra.mxu0 0.0
        %1005 = vmatpush.msra.mxu0 0.0
        %1006 = vmatpush.msra.mxu0 0.0
        %1007 = vmatpush.msra.mxu0 %v989
        %1008 = vmatpush.msra.mxu0 %v988
        %1009 = vmatpush.msra.mxu0 %v987
        %1010 = vmatpush.msra.mxu0 %v986
        %1011 = vmatmul.f32.gmra.mxu0 %v393
        %v1012 = vpop.f32.mrf.mxu0
        %v1013 = vadd.f32 %v993, %v1012
        %1014 = vdwg.mxu0
        %s1015 = scalar_lea.vmem %s4, 96
        %v1016 = vld [vmem:[%s1015] sm:$0xff]
        %v1017 = vld [vmem:[%s1015 + $0x8] sm:$0xff]
        %v1018 = vld [vmem:[%s1015 + $0x10] sm:$0xff]
        %v1019 = vld [vmem:[%s1015 + $0x18] sm:$0xff]
        %s1020 = scalar_lea.vmem %s5, 3
        %v1021 = vld [vmem:[%s1020] sm:$0x1]
        %v1023 = vperm.slane %v1021, 0
        %1025 = vmatpush.msra.mxu0 0.0
        %1026 = vmatpush.msra.mxu0 0.0
        %1027 = vmatpush.msra.mxu0 0.0
        %1028 = vmatpush.msra.mxu0 0.0
        %1029 = vmatpush.msra.mxu0 0.0
        %1030 = vmatpush.msra.mxu0 0.0
        %1031 = vmatpush.msra.mxu0 0.0
        %1032 = vmatpush.msra.mxu0 0.0
        %1033 = vmatpush.msra.mxu0 0.0
        %1034 = vmatpush.msra.mxu0 0.0
        %1035 = vmatpush.msra.mxu0 0.0
        %1036 = vmatpush.msra.mxu0 0.0
        %1037 = vmatpush.msra.mxu0 %v1019
        %1038 = vmatpush.msra.mxu0 %v1018
        %1039 = vmatpush.msra.mxu0 %v1017
        %1040 = vmatpush.msra.mxu0 %v1016
        %1041 = vmatmul.f32.gmra.mxu0 %v424
        %v1042 = vpop.f32.mrf.mxu0
        %v1043 = vadd.f32 %v1023, %v1042
        %1044 = vmatmul.f32.gmra.mxu0 %v427
        %v1045 = vpop.f32.mrf.mxu0
        %v1046 = vadd.f32 %v1023, %v1045
        %1047 = vdwg.mxu0
        %s1048 = scalar_lea.vmem %s6, 96
        %v1049 = vld [vmem:[%s1048] sm:$0xff]
        %v1050 = vld [vmem:[%s1048 + $0x8] sm:$0xff]
        %v1051 = vld [vmem:[%s1048 + $0x10] sm:$0xff]
        %v1052 = vld [vmem:[%s1048 + $0x18] sm:$0xff]
        %s1053 = scalar_lea.vmem %s7, 3
        %v1054 = vld [vmem:[%s1053] sm:$0x1]
        %v1056 = vperm.slane %v1054, 0
        %1058 = vmatpush.msra.mxu0 0.0
        %1059 = vmatpush.msra.mxu0 0.0
        %1060 = vmatpush.msra.mxu0 0.0
        %1061 = vmatpush.msra.mxu0 0.0
        %1062 = vmatpush.msra.mxu0 0.0
        %1063 = vmatpush.msra.mxu0 0.0
        %1064 = vmatpush.msra.mxu0 0.0
        %1065 = vmatpush.msra.mxu0 0.0
        %1066 = vmatpush.msra.mxu0 0.0
        %1067 = vmatpush.msra.mxu0 0.0
        %1068 = vmatpush.msra.mxu0 0.0
        %1069 = vmatpush.msra.mxu0 0.0
        %1070 = vmatpush.msra.mxu0 %v1052
        %1071 = vmatpush.msra.mxu0 %v1051
        %1072 = vmatpush.msra.mxu0 %v1050
        %1073 = vmatpush.msra.mxu0 %v1049
        %1074 = vmatmul.f32.gmra.mxu0 %v424
        %v1075 = vpop.f32.mrf.mxu0
        %v1076 = vadd.f32 %v1056, %v1075
        %1077 = vmatmul.f32.gmra.mxu0 %v427
        %v1078 = vpop.f32.mrf.mxu0
        %v1079 = vadd.f32 %v1056, %v1078
        %1080 = vdwg.mxu0
        %v1082 = vsel %vm483, %v1013, 0
        %v1085 = vsel %vm483, %v1043, 0
        %v1088 = vsel %vm483, %v1046, 0
        %1090 = vmatpush.xpose.msra.mxu0 0.0
        %1091 = vmatpush.xpose.msra.mxu0 0.0
        %1092 = vmatpush.xpose.msra.mxu0 0.0
        %1093 = vmatpush.xpose.msra.mxu0 0.0
        %1094 = vmatpush.xpose.msra.mxu0 0.0
        %1095 = vmatpush.xpose.msra.mxu0 0.0
        %1096 = vmatpush.xpose.msra.mxu0 0.0
        %1097 = vmatpush.xpose.msra.mxu0 0.0
        %1098 = vmatpush.xpose.msra.mxu0 0.0
        %1099 = vmatpush.xpose.msra.mxu0 0.0
        %1100 = vmatpush.xpose.msra.mxu0 0.0
        %1101 = vmatpush.xpose.msra.mxu0 0.0
        %1102 = vmatpush.xpose.msra.mxu0 0.0
        %1103 = vmatpush.xpose.msra.mxu0 0.0
        %1104 = vmatpush.xpose.msra.mxu0 %v1088
        %1105 = vmatpush.xpose.msra.mxu0 %v1085
        %1106 = vmatmul.f32.gmra.mxu0 %v1082
        %v1107 = vpop.f32.mrf.mxu0
        %v1108 = vadd.f32 0.0, %v1107
        %1109 = vdwg.mxu0
        %v1110 = vmul.f32 %v1108, 0.35355338
        %v1111 = vsel %vm514, %v1110, -inf
        %1112 = vmax.xlane.f32.xlu0 %v1111
        %v1113 = vpop.xlane.xlu0 %1112
        %v1114 = vsub.f32 %v1110, %v1113
        %v1115 = vmul.f32 %v1114, 1.442695
        %v1116 = vpow.pop %v1115
        %v1117 = vsel %vm514, %v1116, 0.0
        %1118 = vadd.xlane.f32.xlu0 %v1117
        %v1119 = vpop.xlane.xlu0 %1118
        %v1120 = vrcp.pop %v1119
        %v1121 = vmul.f32 %v1119, %v1120
        %v1122 = vsub.f32 1.0, %v1121
        %v1123 = vmul.f32 %v1120, %v1122
        %v1124 = vadd.f32 %v1120, %v1123
        %vm1125 = vweird.f32 %v1119
        %vm1126 = vweird.f32 %v1120
        %vm1127 = vmor %vm1125, %vm1126
        %v1128 = vsel %vm1127, %v1120, %v1124
        %v1129 = vand.u32 2147483647, %v1119
        %vm1130 = vcmp.eq.f32.partialorder %v1129, 8.507059e+37
        %v1131 = vand.u32 %v1119, 2147483648
        %v1132 = vor.u32 1.1754944e-38, %v1131
        %v1133 = vsel %vm1130, %v1132, %v1128
        %v1134 = vmul.f32 %v1116, %v1133
        %v1136 = vsel %vm514, %v1134, 0
        %1138 = vmatpush.msra.mxu0 0.0
        %1139 = vmatpush.msra.mxu0 0.0
        %1140 = vmatpush.msra.mxu0 0.0
        %1141 = vmatpush.msra.mxu0 0.0
        %1142 = vmatpush.msra.mxu0 0.0
        %1143 = vmatpush.msra.mxu0 0.0
        %1144 = vmatpush.msra.mxu0 0.0
        %1145 = vmatpush.msra.mxu0 0.0
        %1146 = vmatpush.msra.mxu0 0.0
        %1147 = vmatpush.msra.mxu0 0.0
        %1148 = vmatpush.msra.mxu0 0.0
        %1149 = vmatpush.msra.mxu0 0.0
        %1150 = vmatpush.msra.mxu0 0.0
        %1151 = vmatpush.msra.mxu0 0.0
        %1152 = vmatpush.msra.mxu0 %v1079
        %1153 = vmatpush.msra.mxu0 %v1076
        %1154 = vmatmul.f32.gmra.mxu0 %v1136
        %v1155 = vpop.f32.mrf.mxu0
        %v1156 = vadd.f32 0.0, %v1155
        %1157 = vdwg.mxu0
        %s1158 = scalar_lea.vmem %s8, 24
        %v1159 = vld [vmem:[%s1158] sm:$0xff]
        %v1161 = vsel %vm483, %v1156, 0
        %1163 = vmatpush.msra.mxu0 0.0
        %1164 = vmatpush.msra.mxu0 0.0
        %1165 = vmatpush.msra.mxu0 0.0
        %1166 = vmatpush.msra.mxu0 0.0
        %1167 = vmatpush.msra.mxu0 0.0
        %1168 = vmatpush.msra.mxu0 0.0
        %1169 = vmatpush.msra.mxu0 0.0
        %1170 = vmatpush.msra.mxu0 0.0
        %1171 = vmatpush.msra.mxu0 0.0
        %1172 = vmatpush.msra.mxu0 0.0
        %1173 = vmatpush.msra.mxu0 0.0
        %1174 = vmatpush.msra.mxu0 0.0
        %1175 = vmatpush.msra.mxu0 0.0
        %1176 = vmatpush.msra.mxu0 0.0
        %1177 = vmatpush.msra.mxu0 0.0
        %1178 = vmatpush.msra.mxu0 %v1159
        %1179 = vmatmul.f32.gmra.mxu0 %v1161
        %v1180 = vpop.f32.mrf.mxu0
        %v1181 = vadd.f32 0.0, %v1180
        %1182 = vdwg.mxu0
        %v1183 = vadd.f32 %v984, %v1181
        %1184 = vst.msk [vmem:[%s365] sm:$0xff] %vm391, %v1183
        %s1185 = sand.u32 %s252, 1
        %s1186 = scalar_lea.sflag [#allocation3], %s1185
        %s1187 = sand.u32 %s252, 1
        %s1188 = smul.addr %s1187, 8
        %s1189 = scalar_lea.vmem [#allocation2], %s1188
        // Predicated region
        $region61: #{cross_attention_forward.1} parent=59 // pred_check
          %p1190 = pneg %p262
        $region62: #{cross_attention_forward.1} parent=59 // pred_check_branch
          %1192 = sbr.rel (%p1190) target = $region64
        $region63: #{cross_attention_forward.1} parent=59 // pred_region
          %1194 = vsyncadd %s1186, 0
          %s1195 = smul.addr %s24, 8
          %s1196 = scalar_lea.hbm %s10, %s1195
          %s1198 = sshll.u32 %s1189, 4
          %s1199 = int_to_ptr.vmem [resolvable:$true] %s1198
          %s1200 = sshll.u32 %s1196, 4
          %s1201 = int_to_ptr.hbm [resolvable:$true] %s1200
          %1203 = dma.vmem_to_hbm [thread:$0]  %s1199, 128, %s1201, %s1186
        $region64: #{cross_attention_forward.1} parent=59 // pred_fallthru
          _
      $region60: #{cross_attention_forward.1} parent=5 // pred_fallthru
        _
      %p1204 = scmp.le.s32.totalorder 2, %s19
      // Predicated region
      $region65: #{cross_attention_forward.1} parent=5 // pred_check
        %p1205 = pneg %p1204
      $region66: #{cross_attention_forward.1} parent=5 // pred_check_branch
        %1207 = sbr.rel (%p1205) target = $region68
      $region67: #{cross_attention_forward.1} parent=5 // pred_region
        %s1208 = ssub.s32 %s19, 2
        // Predicated region
        $region69: #{cross_attention_forward.1} parent=67 // pred_check
          %p1209 = pneg %p268
        $region70: #{cross_attention_forward.1} parent=67 // pred_check_branch
          %1211 = sbr.rel (%p1209) target = $region72
        $region71: #{cross_attention_forward.1} parent=67 // pred_region
          %s1212 = sand.u32 %s253, 1
          %s1213 = scalar_lea.sflag [#allocation3], %s1212
          %s1214 = sand.u32 %s253, 1
          %s1215 = smul.addr %s1214, 8
          %s1216 = scalar_lea.vmem [#allocation2], %s1215
          %1218 = dma.done %s1213, 128
        $region72: #{cross_attention_forward.1} parent=67 // pred_fallthru
          _
      $region68: #{cross_attention_forward.1} parent=5 // pred_fallthru
        _
    $region6: #{cross_attention_forward.1} parent=1 // loop_footer
      %s23 = sadd.s32 1, %s19
    $region7: #{cross_attention_forward.1} parent=1 // loop_footer_branch
      %18 = sbr.rel target = $region3
    $region8: #{cross_attention_forward.1} parent=1 // loop_exit
      _
    %1219 = vsyncpa [#allocation3], 1
    %s1220 = scalar_lea.sflag [#allocation3], 1
    %1221 = vsyncpa %s1220, 1

</llo_original>
